<compile_context>
chip_gen: v7x
topology: tpu7x:2x2x1
jax: 0.10.0
libtpu: 0.0.40
codegen_flags: <defaults>
</compile_context>

<pallas_src>
import functools

import jax
import jax.numpy as jnp
from jax.experimental import pallas as pl
from jax.experimental.pallas import tpu as pltpu


def _pick_block_b(B: int, N: int) -> int:
    """Batches per grid step: aim for >=128 token-rows per fused GEMM, but keep >=2 grid
    steps when B allows so both v7x TensorCores get work."""
    target = max(1, 128 // max(N, 1))
    target = min(target, B)
    if B >= 2:
        target = max(1, min(target, B // 2))
    best = 1
    for d in range(1, target + 1):
        if B % d == 0:
            best = d
    return best


def _make_attention_kernel(block_b: int, num_heads: int, head_dim: int, dim: int,
                           n_tokens: int):
    """Builds the fused attention kernel body for a (block_b, N, C) batch block."""
    M = block_b * n_tokens

    def kernel(x_ref, wqkv_ref, wproj_ref, bias_ref, out_ref, attn_ref):
        # x_ref:    (block_b, N, C)
        # wqkv_ref: (3, C, C)   -- torch qkv weight (rows of nn.Linear), q rows pre-scaled
        # wproj_ref:(H, hd, C)  -- w_proj.T reshaped, so head h slice is a dense (hd, C)
        # bias_ref: (1, C)
        in_dt = x_ref.dtype
        x_flat = x_ref[...].reshape(M, dim)                         # (M, C), native dtype

        # Fused, lane-dense QKV GEMMs across all batches and heads at once:
        # (M, C) @ (C, C)^T -> (M, C).  f32 accumulation, MXU fed in the input dtype.
        def lin(w):
            return jnp.einsum("mc,dc->md", x_flat, w,
                              preferred_element_type=jnp.float32).astype(in_dt)

        q_all = lin(wqkv_ref[0])                                    # softmax scale folded in
        k_all = lin(wqkv_ref[1])
        v_all = lin(wqkv_ref[2])

        q3 = q_all.reshape(block_b, n_tokens, dim)
        k3 = k_all.reshape(block_b, n_tokens, dim)
        v3 = v_all.reshape(block_b, n_tokens, dim)

        y = jnp.zeros((M, dim), jnp.float32)                        # projection accumulator
        for h in range(num_heads):                                  # static, small
            cs = h * head_dim
            qh = q3[:, :, cs:cs + head_dim]                         # (block_b, N, hd)
            kh = k3[:, :, cs:cs + head_dim]
            vh = v3[:, :, cs:cs + head_dim]

            # Scores + softmax in f32, batched over the block_b axis.
            s = jnp.einsum("bnd,bmd->bnm", qh, kh,
                           preferred_element_type=jnp.float32)      # (block_b, N, N)
            s = s - jnp.max(s, axis=-1, keepdims=True)
            p = jnp.exp(s)
            p = p / jnp.sum(p, axis=-1, keepdims=True)              # exact: rows sum to 1

            # attn_drop is Dropout(p=0.0) -> identity.
            for b in range(block_b):                                # static, small
                attn_ref[b, h] = p[b].astype(attn_ref.dtype)

            o = jnp.einsum("bnm,bmd->bnd", p.astype(in_dt), vh,
                           preferred_element_type=jnp.float32)      # (block_b, N, hd)
            # Fold the head axis into the projection (no lane-dim concat), batch collapsed
            # into the GEMM M dimension: (M, hd) @ (hd, C).
            y = y + jnp.dot(o.astype(in_dt).reshape(M, head_dim), wproj_ref[h],
                            preferred_element_type=jnp.float32)

        # proj_drop is Dropout(p=0.0) -> identity.  Bias broadcast happens once here.
        out = (y + bias_ref[...].astype(jnp.float32)).reshape(block_b, n_tokens, dim)
        out_ref[...] = out.astype(out_ref.dtype)

    return kernel


@functools.partial(jax.jit, static_argnames=("num_heads", "attn_dtype"))
def attention_pallas(x, w_qkv, w_proj, b_proj, *, num_heads: int, attn_dtype=None):
    """x: (B, N, C); w_qkv: (3C, C) torch layout; w_proj: (C, C) torch layout; b_proj: (C,)."""
    B, N, C = x.shape
    assert C % num_heads == 0
    head_dim = C // num_heads
    scale = head_dim ** (-0.5)
    block_b = _pick_block_b(B, N)
    attn_dt = x.dtype if attn_dtype is None else jnp.dtype(attn_dtype)

    # nn.Linear computes x @ W.T + b.  qkv rows are ordered [q | k | v], C rows each; the
    # reshape is free.  Fold the softmax scale into the q rows once (weight transform).
    wqkv_r = w_qkv.reshape(3, C, C).astype(x.dtype)
    wqkv_r = wqkv_r.at[0].multiply(jnp.asarray(scale, wqkv_r.dtype))
    # proj weight: one small (C x C) transpose so each head's slice is a dense (hd, C).
    wproj_r = jnp.transpose(w_proj).reshape(num_heads, head_dim, C).astype(x.dtype)
    bias_2d = b_proj.reshape(1, C)

    kernel = _make_attention_kernel(block_b, num_heads, head_dim, C, N)

    out_shapes = (
        jax.ShapeDtypeStruct((B, N, C), x.dtype),
        jax.ShapeDtypeStruct((B, num_heads, N, N), attn_dt),
    )

    grid_spec = pltpu.PrefetchScalarGridSpec(
        num_scalar_prefetch=0,
        grid=(B // block_b,),
        in_specs=[
            pl.BlockSpec((block_b, N, C), lambda i: (i, 0, 0)),
            pl.BlockSpec((3, C, C), lambda i: (0, 0, 0)),
            pl.BlockSpec((num_heads, head_dim, C), lambda i: (0, 0, 0)),
            pl.BlockSpec((1, C), lambda i: (0, 0)),
        ],
        out_specs=[
            pl.BlockSpec((block_b, N, C), lambda i: (i, 0, 0)),
            pl.BlockSpec((block_b, num_heads, N, N), lambda i: (i, 0, 0, 0)),
        ],
    )

    itemsize = jnp.dtype(x.dtype).itemsize
    attn_itemsize = jnp.dtype(attn_dt).itemsize

    # Advisory cost estimate (qkv linears + scores + PV + projection; exp per score entry).
    flops = (2 * B * N * C * 3 * C) + (4 * B * num_heads * N * N * head_dim) + (2 * B * N * C * C)
    bytes_accessed = (
        2 * B * N * C * itemsize                      # x in, out
        + B * num_heads * N * N * attn_itemsize       # attn writeback
        + (3 * C * C + C * C + C) * itemsize          # weights + bias
    )
    cost = pl.CostEstimate(flops=int(flops),
                           transcendentals=int(B * num_heads * N * N),
                           bytes_accessed=int(bytes_accessed))

    # Scoped-VMEM budget: pipelined x/out/attn blocks + weights + q/k/v temps + slack, capped
    # below physical VMEM with headroom (v7x has only 64 MiB per TensorCore).
    blk_bytes = 2 * block_b * N * C * itemsize + block_b * num_heads * N * N * attn_itemsize
    w_bytes = (3 * C * C + num_heads * head_dim * C + C) * itemsize
    tmp_bytes = 3 * block_b * N * C * itemsize + block_b * N * C * 4
    need = 2 * (blk_bytes + w_bytes) + tmp_bytes + (8 << 20)
    try:
        cap = int(pltpu.get_tpu_info().vmem_capacity_bytes) - (16 << 20)
    except Exception:  # pragma: no cover - conservative fallback
        cap = 48 << 20
    vmem_limit = int(max(16 << 20, min(need, cap)))

    return pl.pallas_call(
        kernel,
        out_shape=out_shapes,
        grid_spec=grid_spec,
        compiler_params=pltpu.CompilerParams(
            dimension_semantics=("parallel",),
            vmem_limit_bytes=vmem_limit,
        ),
        cost_estimate=cost,
    )(x, wqkv_r, wproj_r, bias_2d)


def attention_reference(x, w_qkv, w_proj, b_proj, *, num_heads: int):
    """Pure-JAX mirror of the PyTorch forward for correctness checking."""
    B, N, C = x.shape
    hd = C // num_heads
    scale = hd ** (-0.5)
    qkv = jnp.einsum("bnc,oc->bno", x, w_qkv)                       # (B, N, 3C)
    qkv = qkv.reshape(B, N, 3, num_heads, hd).transpose(2, 0, 3, 1, 4)
    q, k, v = qkv[0], qkv[1], qkv[2]                                # (B, H, N, hd)
    attn = jnp.einsum("bhnd,bhmd->bhnm", q, k) * scale
    attn = jax.nn.softmax(attn, axis=-1)
    out = jnp.einsum("bhnm,bhmd->bhnd", attn, v)                    # (B, H, N, hd)
    out = out.transpose(0, 2, 1, 3).reshape(B, N, C)
    out = jnp.einsum("bnc,oc->bno", out, w_proj) + b_proj
    return out, attn


if __name__ == "__main__":
    # Small, module-consistent shapes: dim=32, num_heads=4 (head_dim=8), B=2, N=8 tokens.
    B, N, C = 2, 8, 32
    num_heads = 4

    key = jax.random.PRNGKey(0)
    kx, kqkv, kproj, kb = jax.random.split(key, 4)

    x = jax.random.normal(kx, (B, N, C), dtype=jnp.float32)
    # Deterministic synthetic parameters (torch nn.Linear weight layout: (out, in)).
    w_qkv = jax.random.normal(kqkv, (3 * C, C), dtype=jnp.float32) * (1.0 / jnp.sqrt(C))
    w_proj = jax.random.normal(kproj, (C, C), dtype=jnp.float32) * (1.0 / jnp.sqrt(C))
    b_proj = jax.random.normal(kb, (C,), dtype=jnp.float32) * 0.01

    out, attn = attention_pallas(x, w_qkv, w_proj, b_proj, num_heads=num_heads)
    jax.block_until_ready((out, attn))

    out_ref, attn_ref = attention_reference(x, w_qkv, w_proj, b_proj, num_heads=num_heads)
    # Exact softmax division in-kernel; remaining differences are f32 matmul rounding and
    # the (one-time) folding of the softmax scale into the q weight.
    assert jnp.allclose(out, out_ref, atol=2e-3, rtol=2e-3), "output mismatch"
    assert jnp.allclose(attn, attn_ref, atol=1e-3, rtol=1e-3), "attn mismatch"

    print("KERNEL_OK")
</pallas_src>

<mosaic_0001>
module attributes {stable_mosaic.version = 11 : i64} {
  func.func @kernel(%arg0: i32, %arg1: memref<1x8x32xf32, #tpu.memory_space<vmem>>, %arg2: memref<3x32x32xf32, #tpu.memory_space<vmem>>, %arg3: memref<4x8x32xf32, #tpu.memory_space<vmem>>, %arg4: memref<1x32xf32, #tpu.memory_space<vmem>>, %arg5: memref<1x8x32xf32, #tpu.memory_space<vmem>>, %arg6: memref<1x4x8x8xf32, #tpu.memory_space<vmem>>) attributes {dimension_semantics = [#tpu.dimension_semantics<parallel>], iteration_bounds = array<i64: 2>, scalar_prefetch = 0 : i64, scratch_operands = 0 : i64, tpu.core_type = #tpu.core_type<tc>, window_params = [{transform_indices = @transform_0, window_bounds = array<i64: 1, 8, 32>}, {pipeline_mode = #tpu.pipeline_mode<synchronous>, transform_indices = @transform_1, window_bounds = array<i64: 3, 32, 32>}, {pipeline_mode = #tpu.pipeline_mode<synchronous>, transform_indices = @transform_2, window_bounds = array<i64: 4, 8, 32>}, {pipeline_mode = #tpu.pipeline_mode<synchronous>, transform_indices = @transform_3, window_bounds = array<i64: 1, 32>}, {transform_indices = @transform_4, window_bounds = array<i64: 1, 8, 32>}, {transform_indices = @transform_5, window_bounds = array<i64: 1, 4, 8, 8>}]} {
    %c0 = arith.constant 0 : index
    %c0_0 = arith.constant 0 : index
    %c0_1 = arith.constant 0 : index
    %0 = vector.load %arg1[%c0, %c0_0, %c0_1] : memref<1x8x32xf32, #tpu.memory_space<vmem>>, vector<1x8x32xf32>
    %1 = vector.shape_cast %0 : vector<1x8x32xf32> to vector<8x32xf32>
    %c0_2 = arith.constant 0 : index
    %c0_3 = arith.constant 0 : index
    %c0_4 = arith.constant 0 : index
    %2 = vector.load %arg2[%c0_2, %c0_3, %c0_4] : memref<3x32x32xf32, #tpu.memory_space<vmem>>, vector<1x32x32xf32>
    %3 = vector.shape_cast %2 : vector<1x32x32xf32> to vector<32x32xf32>
    "tpu.trace_start"() <{level = 10 : i32, message = "mc,dc->md"}> : () -> ()
    %cst = arith.constant dense<0.000000e+00> : vector<8x32xf32>
    %4 = tpu.matmul %1, %3, %cst {dimension_numbers = #tpu.dot_dimension_numbers<[1], [1], [0], [0], [0, 0, 1, 0], [], []>} : vector<8x32xf32>, vector<32x32xf32>, vector<8x32xf32> -> vector<8x32xf32>
    "tpu.trace_stop"() : () -> ()
    %c1 = arith.constant 1 : index
    %c0_5 = arith.constant 0 : index
    %c0_6 = arith.constant 0 : index
    %5 = vector.load %arg2[%c1, %c0_5, %c0_6] : memref<3x32x32xf32, #tpu.memory_space<vmem>>, vector<1x32x32xf32>
    %6 = vector.shape_cast %5 : vector<1x32x32xf32> to vector<32x32xf32>
    "tpu.trace_start"() <{level = 10 : i32, message = "mc,dc->md"}> : () -> ()
    %cst_7 = arith.constant dense<0.000000e+00> : vector<8x32xf32>
    %7 = tpu.matmul %1, %6, %cst_7 {dimension_numbers = #tpu.dot_dimension_numbers<[1], [1], [0], [0], [0, 0, 1, 0], [], []>} : vector<8x32xf32>, vector<32x32xf32>, vector<8x32xf32> -> vector<8x32xf32>
    "tpu.trace_stop"() : () -> ()
    %c2 = arith.constant 2 : index
    %c0_8 = arith.constant 0 : index
    %c0_9 = arith.constant 0 : index
    %8 = vector.load %arg2[%c2, %c0_8, %c0_9] : memref<3x32x32xf32, #tpu.memory_space<vmem>>, vector<1x32x32xf32>
    %9 = vector.shape_cast %8 : vector<1x32x32xf32> to vector<32x32xf32>
    "tpu.trace_start"() <{level = 10 : i32, message = "mc,dc->md"}> : () -> ()
    %cst_10 = arith.constant dense<0.000000e+00> : vector<8x32xf32>
    %10 = tpu.matmul %1, %9, %cst_10 {dimension_numbers = #tpu.dot_dimension_numbers<[1], [1], [0], [0], [0, 0, 1, 0], [], []>} : vector<8x32xf32>, vector<32x32xf32>, vector<8x32xf32> -> vector<8x32xf32>
    "tpu.trace_stop"() : () -> ()
    %11 = vector.shape_cast %4 : vector<8x32xf32> to vector<1x8x32xf32>
    %12 = vector.shape_cast %7 : vector<8x32xf32> to vector<1x8x32xf32>
    %13 = vector.shape_cast %10 : vector<8x32xf32> to vector<1x8x32xf32>
    %cst_11 = arith.constant 0.000000e+00 : f32
    %14 = vector.broadcast %cst_11 : f32 to vector<8x32xf32>
    %15 = vector.extract_strided_slice %11 {offsets = [0, 0, 0], sizes = [1, 8, 8], strides = [1, 1, 1]} : vector<1x8x32xf32> to vector<1x8x8xf32>
    %16 = vector.extract_strided_slice %12 {offsets = [0, 0, 0], sizes = [1, 8, 8], strides = [1, 1, 1]} : vector<1x8x32xf32> to vector<1x8x8xf32>
    %17 = vector.extract_strided_slice %13 {offsets = [0, 0, 0], sizes = [1, 8, 8], strides = [1, 1, 1]} : vector<1x8x32xf32> to vector<1x8x8xf32>
    "tpu.trace_start"() <{level = 10 : i32, message = "bnd,bmd->bnm"}> : () -> ()
    %cst_12 = arith.constant dense<0.000000e+00> : vector<1x8x8xf32>
    %18 = tpu.matmul %15, %16, %cst_12 {dimension_numbers = #tpu.dot_dimension_numbers<[2], [2], [1], [1], [0, 0, 0, 1, 1, 1], [0], [0]>} : vector<1x8x8xf32>, vector<1x8x8xf32>, vector<1x8x8xf32> -> vector<1x8x8xf32>
    "tpu.trace_stop"() : () -> ()
    %cst_13 = arith.constant dense<0xFF800000> : vector<1x8xf32>
    %19 = vector.multi_reduction <maximumf>, %18, %cst_13 [2] : vector<1x8x8xf32> to vector<1x8xf32>
    %20 = vector.shape_cast %19 : vector<1x8xf32> to vector<1x8x1xf32>
    %21 = vector.broadcast %20 : vector<1x8x1xf32> to vector<1x8x8xf32>
    %22 = arith.subf %18, %21 : vector<1x8x8xf32>
    %23 = math.exp %22 : vector<1x8x8xf32>
    %cst_14 = arith.constant dense<0.000000e+00> : vector<1x8xf32>
    %24 = vector.multi_reduction <add>, %23, %cst_14 [2] : vector<1x8x8xf32> to vector<1x8xf32>
    %25 = vector.shape_cast %24 : vector<1x8xf32> to vector<1x8x1xf32>
    %26 = vector.broadcast %25 : vector<1x8x1xf32> to vector<1x8x8xf32>
    %27 = arith.divf %23, %26 : vector<1x8x8xf32>
    %28 = vector.shape_cast %27 : vector<1x8x8xf32> to vector<8x8xf32>
    %c0_15 = arith.constant 0 : index
    %c0_16 = arith.constant 0 : index
    %c0_17 = arith.constant 0 : index
    %c0_18 = arith.constant 0 : index
    %29 = vector.load %arg6[%c0_15, %c0_16, %c0_17, %c0_18] : memref<1x4x8x8xf32, #tpu.memory_space<vmem>>, vector<1x1x8x8xf32>
    %30 = vector.shape_cast %29 : vector<1x1x8x8xf32> to vector<8x8xf32>
    %31 = vector.shape_cast %28 : vector<8x8xf32> to vector<1x1x8x8xf32>
    tpu.vector_store %arg6[%c0_15, %c0_16, %c0_17, %c0_18], %31 {strides = array<i32>} : memref<1x4x8x8xf32, #tpu.memory_space<vmem>>, vector<1x1x8x8xf32>,
    "tpu.trace_start"() <{level = 10 : i32, message = "bnm,bmd->bnd"}> : () -> ()
    %cst_19 = arith.constant dense<0.000000e+00> : vector<1x8x8xf32>
    %32 = tpu.matmul %27, %17, %cst_19 {dimension_numbers = #tpu.dot_dimension_numbers<[2], [1], [1], [2], [0, 0, 0, 1, 1, 2], [0], [0]>} : vector<1x8x8xf32>, vector<1x8x8xf32>, vector<1x8x8xf32> -> vector<1x8x8xf32>
    "tpu.trace_stop"() : () -> ()
    %33 = vector.shape_cast %32 : vector<1x8x8xf32> to vector<8x8xf32>
    %c0_20 = arith.constant 0 : index
    %c0_21 = arith.constant 0 : index
    %c0_22 = arith.constant 0 : index
    %34 = vector.load %arg3[%c0_20, %c0_21, %c0_22] : memref<4x8x32xf32, #tpu.memory_space<vmem>>, vector<1x8x32xf32>
    %35 = vector.shape_cast %34 : vector<1x8x32xf32> to vector<8x32xf32>
    %cst_23 = arith.constant dense<0.000000e+00> : vector<8x32xf32>
    %36 = tpu.matmul %33, %35, %cst_23 {dimension_numbers = #tpu.dot_dimension_numbers<[1], [0], [0], [1], [0, 0, 1, 1], [], []>} : vector<8x8xf32>, vector<8x32xf32>, vector<8x32xf32> -> vector<8x32xf32>
    %37 = arith.addf %14, %36 : vector<8x32xf32>
    %38 = vector.extract_strided_slice %11 {offsets = [0, 0, 8], sizes = [1, 8, 8], strides = [1, 1, 1]} : vector<1x8x32xf32> to vector<1x8x8xf32>
    %39 = vector.extract_strided_slice %12 {offsets = [0, 0, 8], sizes = [1, 8, 8], strides = [1, 1, 1]} : vector<1x8x32xf32> to vector<1x8x8xf32>
    %40 = vector.extract_strided_slice %13 {offsets = [0, 0, 8], sizes = [1, 8, 8], strides = [1, 1, 1]} : vector<1x8x32xf32> to vector<1x8x8xf32>
    "tpu.trace_start"() <{level = 10 : i32, message = "bnd,bmd->bnm"}> : () -> ()
    %cst_24 = arith.constant dense<0.000000e+00> : vector<1x8x8xf32>
    %41 = tpu.matmul %38, %39, %cst_24 {dimension_numbers = #tpu.dot_dimension_numbers<[2], [2], [1], [1], [0, 0, 0, 1, 1, 1], [0], [0]>} : vector<1x8x8xf32>, vector<1x8x8xf32>, vector<1x8x8xf32> -> vector<1x8x8xf32>
    "tpu.trace_stop"() : () -> ()
    %cst_25 = arith.constant dense<0xFF800000> : vector<1x8xf32>
    %42 = vector.multi_reduction <maximumf>, %41, %cst_25 [2] : vector<1x8x8xf32> to vector<1x8xf32>
    %43 = vector.shape_cast %42 : vector<1x8xf32> to vector<1x8x1xf32>
    %44 = vector.broadcast %43 : vector<1x8x1xf32> to vector<1x8x8xf32>
    %45 = arith.subf %41, %44 : vector<1x8x8xf32>
    %46 = math.exp %45 : vector<1x8x8xf32>
    %cst_26 = arith.constant dense<0.000000e+00> : vector<1x8xf32>
    %47 = vector.multi_reduction <add>, %46, %cst_26 [2] : vector<1x8x8xf32> to vector<1x8xf32>
    %48 = vector.shape_cast %47 : vector<1x8xf32> to vector<1x8x1xf32>
    %49 = vector.broadcast %48 : vector<1x8x1xf32> to vector<1x8x8xf32>
    %50 = arith.divf %46, %49 : vector<1x8x8xf32>
    %51 = vector.shape_cast %50 : vector<1x8x8xf32> to vector<8x8xf32>
    %c0_27 = arith.constant 0 : index
    %c1_28 = arith.constant 1 : index
    %c0_29 = arith.constant 0 : index
    %c0_30 = arith.constant 0 : index
    %52 = vector.load %arg6[%c0_27, %c1_28, %c0_29, %c0_30] : memref<1x4x8x8xf32, #tpu.memory_space<vmem>>, vector<1x1x8x8xf32>
    %53 = vector.shape_cast %52 : vector<1x1x8x8xf32> to vector<8x8xf32>
    %54 = vector.shape_cast %51 : vector<8x8xf32> to vector<1x1x8x8xf32>
    tpu.vector_store %arg6[%c0_27, %c1_28, %c0_29, %c0_30], %54 {strides = array<i32>} : memref<1x4x8x8xf32, #tpu.memory_space<vmem>>, vector<1x1x8x8xf32>,
    "tpu.trace_start"() <{level = 10 : i32, message = "bnm,bmd->bnd"}> : () -> ()
    %cst_31 = arith.constant dense<0.000000e+00> : vector<1x8x8xf32>
    %55 = tpu.matmul %50, %40, %cst_31 {dimension_numbers = #tpu.dot_dimension_numbers<[2], [1], [1], [2], [0, 0, 0, 1, 1, 2], [0], [0]>} : vector<1x8x8xf32>, vector<1x8x8xf32>, vector<1x8x8xf32> -> vector<1x8x8xf32>
    "tpu.trace_stop"() : () -> ()
    %56 = vector.shape_cast %55 : vector<1x8x8xf32> to vector<8x8xf32>
    %c1_32 = arith.constant 1 : index
    %c0_33 = arith.constant 0 : index
    %c0_34 = arith.constant 0 : index
    %57 = vector.load %arg3[%c1_32, %c0_33, %c0_34] : memref<4x8x32xf32, #tpu.memory_space<vmem>>, vector<1x8x32xf32>
    %58 = vector.shape_cast %57 : vector<1x8x32xf32> to vector<8x32xf32>
    %cst_35 = arith.constant dense<0.000000e+00> : vector<8x32xf32>
    %59 = tpu.matmul %56, %58, %cst_35 {dimension_numbers = #tpu.dot_dimension_numbers<[1], [0], [0], [1], [0, 0, 1, 1], [], []>} : vector<8x8xf32>, vector<8x32xf32>, vector<8x32xf32> -> vector<8x32xf32>
    %60 = arith.addf %37, %59 : vector<8x32xf32>
    %61 = vector.extract_strided_slice %11 {offsets = [0, 0, 16], sizes = [1, 8, 8], strides = [1, 1, 1]} : vector<1x8x32xf32> to vector<1x8x8xf32>
    %62 = vector.extract_strided_slice %12 {offsets = [0, 0, 16], sizes = [1, 8, 8], strides = [1, 1, 1]} : vector<1x8x32xf32> to vector<1x8x8xf32>
    %63 = vector.extract_strided_slice %13 {offsets = [0, 0, 16], sizes = [1, 8, 8], strides = [1, 1, 1]} : vector<1x8x32xf32> to vector<1x8x8xf32>
    "tpu.trace_start"() <{level = 10 : i32, message = "bnd,bmd->bnm"}> : () -> ()
    %cst_36 = arith.constant dense<0.000000e+00> : vector<1x8x8xf32>
    %64 = tpu.matmul %61, %62, %cst_36 {dimension_numbers = #tpu.dot_dimension_numbers<[2], [2], [1], [1], [0, 0, 0, 1, 1, 1], [0], [0]>} : vector<1x8x8xf32>, vector<1x8x8xf32>, vector<1x8x8xf32> -> vector<1x8x8xf32>
    "tpu.trace_stop"() : () -> ()
    %cst_37 = arith.constant dense<0xFF800000> : vector<1x8xf32>
    %65 = vector.multi_reduction <maximumf>, %64, %cst_37 [2] : vector<1x8x8xf32> to vector<1x8xf32>
    %66 = vector.shape_cast %65 : vector<1x8xf32> to vector<1x8x1xf32>
    %67 = vector.broadcast %66 : vector<1x8x1xf32> to vector<1x8x8xf32>
    %68 = arith.subf %64, %67 : vector<1x8x8xf32>
    %69 = math.exp %68 : vector<1x8x8xf32>
    %cst_38 = arith.constant dense<0.000000e+00> : vector<1x8xf32>
    %70 = vector.multi_reduction <add>, %69, %cst_38 [2] : vector<1x8x8xf32> to vector<1x8xf32>
    %71 = vector.shape_cast %70 : vector<1x8xf32> to vector<1x8x1xf32>
    %72 = vector.broadcast %71 : vector<1x8x1xf32> to vector<1x8x8xf32>
    %73 = arith.divf %69, %72 : vector<1x8x8xf32>
    %74 = vector.shape_cast %73 : vector<1x8x8xf32> to vector<8x8xf32>
    %c0_39 = arith.constant 0 : index
    %c2_40 = arith.constant 2 : index
    %c0_41 = arith.constant 0 : index
    %c0_42 = arith.constant 0 : index
    %75 = vector.load %arg6[%c0_39, %c2_40, %c0_41, %c0_42] : memref<1x4x8x8xf32, #tpu.memory_space<vmem>>, vector<1x1x8x8xf32>
    %76 = vector.shape_cast %75 : vector<1x1x8x8xf32> to vector<8x8xf32>
    %77 = vector.shape_cast %74 : vector<8x8xf32> to vector<1x1x8x8xf32>
    tpu.vector_store %arg6[%c0_39, %c2_40, %c0_41, %c0_42], %77 {strides = array<i32>} : memref<1x4x8x8xf32, #tpu.memory_space<vmem>>, vector<1x1x8x8xf32>,
    "tpu.trace_start"() <{level = 10 : i32, message = "bnm,bmd->bnd"}> : () -> ()
    %cst_43 = arith.constant dense<0.000000e+00> : vector<1x8x8xf32>
    %78 = tpu.matmul %73, %63, %cst_43 {dimension_numbers = #tpu.dot_dimension_numbers<[2], [1], [1], [2], [0, 0, 0, 1, 1, 2], [0], [0]>} : vector<1x8x8xf32>, vector<1x8x8xf32>, vector<1x8x8xf32> -> vector<1x8x8xf32>
    "tpu.trace_stop"() : () -> ()
    %79 = vector.shape_cast %78 : vector<1x8x8xf32> to vector<8x8xf32>
    %c2_44 = arith.constant 2 : index
    %c0_45 = arith.constant 0 : index
    %c0_46 = arith.constant 0 : index
    %80 = vector.load %arg3[%c2_44, %c0_45, %c0_46] : memref<4x8x32xf32, #tpu.memory_space<vmem>>, vector<1x8x32xf32>
    %81 = vector.shape_cast %80 : vector<1x8x32xf32> to vector<8x32xf32>
    %cst_47 = arith.constant dense<0.000000e+00> : vector<8x32xf32>
    %82 = tpu.matmul %79, %81, %cst_47 {dimension_numbers = #tpu.dot_dimension_numbers<[1], [0], [0], [1], [0, 0, 1, 1], [], []>} : vector<8x8xf32>, vector<8x32xf32>, vector<8x32xf32> -> vector<8x32xf32>
    %83 = arith.addf %60, %82 : vector<8x32xf32>
    %84 = vector.extract_strided_slice %11 {offsets = [0, 0, 24], sizes = [1, 8, 8], strides = [1, 1, 1]} : vector<1x8x32xf32> to vector<1x8x8xf32>
    %85 = vector.extract_strided_slice %12 {offsets = [0, 0, 24], sizes = [1, 8, 8], strides = [1, 1, 1]} : vector<1x8x32xf32> to vector<1x8x8xf32>
    %86 = vector.extract_strided_slice %13 {offsets = [0, 0, 24], sizes = [1, 8, 8], strides = [1, 1, 1]} : vector<1x8x32xf32> to vector<1x8x8xf32>
    "tpu.trace_start"() <{level = 10 : i32, message = "bnd,bmd->bnm"}> : () -> ()
    %cst_48 = arith.constant dense<0.000000e+00> : vector<1x8x8xf32>
    %87 = tpu.matmul %84, %85, %cst_48 {dimension_numbers = #tpu.dot_dimension_numbers<[2], [2], [1], [1], [0, 0, 0, 1, 1, 1], [0], [0]>} : vector<1x8x8xf32>, vector<1x8x8xf32>, vector<1x8x8xf32> -> vector<1x8x8xf32>
    "tpu.trace_stop"() : () -> ()
    %cst_49 = arith.constant dense<0xFF800000> : vector<1x8xf32>
    %88 = vector.multi_reduction <maximumf>, %87, %cst_49 [2] : vector<1x8x8xf32> to vector<1x8xf32>
    %89 = vector.shape_cast %88 : vector<1x8xf32> to vector<1x8x1xf32>
    %90 = vector.broadcast %89 : vector<1x8x1xf32> to vector<1x8x8xf32>
    %91 = arith.subf %87, %90 : vector<1x8x8xf32>
    %92 = math.exp %91 : vector<1x8x8xf32>
    %cst_50 = arith.constant dense<0.000000e+00> : vector<1x8xf32>
    %93 = vector.multi_reduction <add>, %92, %cst_50 [2] : vector<1x8x8xf32> to vector<1x8xf32>
    %94 = vector.shape_cast %93 : vector<1x8xf32> to vector<1x8x1xf32>
    %95 = vector.broadcast %94 : vector<1x8x1xf32> to vector<1x8x8xf32>
    %96 = arith.divf %92, %95 : vector<1x8x8xf32>
    %97 = vector.shape_cast %96 : vector<1x8x8xf32> to vector<8x8xf32>
    %c0_51 = arith.constant 0 : index
    %c3 = arith.constant 3 : index
    %c0_52 = arith.constant 0 : index
    %c0_53 = arith.constant 0 : index
    %98 = vector.load %arg6[%c0_51, %c3, %c0_52, %c0_53] : memref<1x4x8x8xf32, #tpu.memory_space<vmem>>, vector<1x1x8x8xf32>
    %99 = vector.shape_cast %98 : vector<1x1x8x8xf32> to vector<8x8xf32>
    %100 = vector.shape_cast %97 : vector<8x8xf32> to vector<1x1x8x8xf32>
    tpu.vector_store %arg6[%c0_51, %c3, %c0_52, %c0_53], %100 {strides = array<i32>} : memref<1x4x8x8xf32, #tpu.memory_space<vmem>>, vector<1x1x8x8xf32>,
    "tpu.trace_start"() <{level = 10 : i32, message = "bnm,bmd->bnd"}> : () -> ()
    %cst_54 = arith.constant dense<0.000000e+00> : vector<1x8x8xf32>
    %101 = tpu.matmul %96, %86, %cst_54 {dimension_numbers = #tpu.dot_dimension_numbers<[2], [1], [1], [2], [0, 0, 0, 1, 1, 2], [0], [0]>} : vector<1x8x8xf32>, vector<1x8x8xf32>, vector<1x8x8xf32> -> vector<1x8x8xf32>
    "tpu.trace_stop"() : () -> ()
    %102 = vector.shape_cast %101 : vector<1x8x8xf32> to vector<8x8xf32>
    %c3_55 = arith.constant 3 : index
    %c0_56 = arith.constant 0 : index
    %c0_57 = arith.constant 0 : index
    %103 = vector.load %arg3[%c3_55, %c0_56, %c0_57] : memref<4x8x32xf32, #tpu.memory_space<vmem>>, vector<1x8x32xf32>
    %104 = vector.shape_cast %103 : vector<1x8x32xf32> to vector<8x32xf32>
    %cst_58 = arith.constant dense<0.000000e+00> : vector<8x32xf32>
    %105 = tpu.matmul %102, %104, %cst_58 {dimension_numbers = #tpu.dot_dimension_numbers<[1], [0], [0], [1], [0, 0, 1, 1], [], []>} : vector<8x8xf32>, vector<8x32xf32>, vector<8x32xf32> -> vector<8x32xf32>
    %106 = arith.addf %83, %105 : vector<8x32xf32>
    %c0_59 = arith.constant 0 : index
    %c0_60 = arith.constant 0 : index
    %107 = vector.load %arg4[%c0_59, %c0_60] : memref<1x32xf32, #tpu.memory_space<vmem>>, vector<1x32xf32>
    %108 = vector.broadcast %107 : vector<1x32xf32> to vector<8x32xf32>
    %109 = arith.addf %106, %108 : vector<8x32xf32>
    %110 = vector.shape_cast %109 : vector<8x32xf32> to vector<1x8x32xf32>
    %c0_61 = arith.constant 0 : index
    %c0_62 = arith.constant 0 : index
    %c0_63 = arith.constant 0 : index
    %111 = vector.load %arg5[%c0_61, %c0_62, %c0_63] : memref<1x8x32xf32, #tpu.memory_space<vmem>>, vector<1x8x32xf32>
    tpu.vector_store %arg5[%c0_61, %c0_62, %c0_63], %110 {strides = array<i32>} : memref<1x8x32xf32, #tpu.memory_space<vmem>>, vector<1x8x32xf32>,
    return
  }
  func.func @transform_0(%arg0: i32) -> (i32, i32, i32) {
    %c0_i32 = arith.constant 0 : i32
    %c0_i32_0 = arith.constant 0 : i32
    %c0_i32_1 = arith.constant 0 : i32
    return %arg0, %c0_i32, %c0_i32_0 : i32, i32, i32
  }
  func.func @transform_1(%arg0: i32) -> (i32, i32, i32) {
    %c0_i32 = arith.constant 0 : i32
    %c0_i32_0 = arith.constant 0 : i32
    %c0_i32_1 = arith.constant 0 : i32
    %c0_i32_2 = arith.constant 0 : i32
    return %c0_i32, %c0_i32_0, %c0_i32_1 : i32, i32, i32
  }
  func.func @transform_2(%arg0: i32) -> (i32, i32, i32) {
    %c0_i32 = arith.constant 0 : i32
    %c0_i32_0 = arith.constant 0 : i32
    %c0_i32_1 = arith.constant 0 : i32
    %c0_i32_2 = arith.constant 0 : i32
    return %c0_i32, %c0_i32_0, %c0_i32_1 : i32, i32, i32
  }
  func.func @transform_3(%arg0: i32) -> (i32, i32) {
    %c0_i32 = arith.constant 0 : i32
    %c0_i32_0 = arith.constant 0 : i32
    %c0_i32_1 = arith.constant 0 : i32
    return %c0_i32, %c0_i32_0 : i32, i32
  }
  func.func @transform_4(%arg0: i32) -> (i32, i32, i32) {
    %c0_i32 = arith.constant 0 : i32
    %c0_i32_0 = arith.constant 0 : i32
    %c0_i32_1 = arith.constant 0 : i32
    return %arg0, %c0_i32, %c0_i32_0 : i32, i32, i32
  }
  func.func @transform_5(%arg0: i32) -> (i32, i32, i32, i32) {
    %c0_i32 = arith.constant 0 : i32
    %c0_i32_0 = arith.constant 0 : i32
    %c0_i32_1 = arith.constant 0 : i32
    %c0_i32_2 = arith.constant 0 : i32
    return %arg0, %c0_i32, %c0_i32_0, %c0_i32_1 : i32, i32, i32, i32
  }
}

</mosaic_0001>

<llo_original>
// kernel: attention_pallas.1
$region0: #{attention_pallas.1}
  #allocation0 [shape = 'u32[]', space=smem, size = 0x4, offset = 0x4, fixed_abs, tag = 'smem constant byte address 0x4 - core index']
  #allocation1 [shape = 'u32[144,128]{1,0:T(1,128)}', space=vmem, size = 0x12000, scoped, tag = 'internal scratch']
  %s0 = inlined_call_operand.vmem [shape: f32[2,8,32], index: 0, kind: input, shape index: {}]
  %s1 = inlined_call_operand.vmem [shape: f32[3,32,32], index: 1, kind: input, shape index: {}]
  %s2 = inlined_call_operand.vmem [shape: f32[4,8,32], index: 2, kind: input, shape index: {}]
  %s3 = inlined_call_operand.vmem [shape: f32[1,32], index: 3, kind: input, shape index: {}]
  %s4 = inlined_call_operand.hbm [shape: f32[2,8,32], index: 4, kind: output, shape index: {0}]
  %s5 = inlined_call_operand.hbm [shape: f32[2,4,8,8], index: 5, kind: output, shape index: {1}]
  %6 = xla_tuple %s4, %s5
  %s7 = sld [smem:[#allocation0]]
  $region57: #{attention_pallas.1} parent=0
    _
  %s9 = ssub.s32 1, %s7
  %s10 = scalar_select 0, %s9, %s7
  $region1: #{attention_pallas.1} parent=0
    #allocation2 [shape = 'u8[8192]{0}', space=vmem, size = 0x2000, scoped, tag = 'output window, operand 0']
    #allocation3 [shape = 's32[2]{0}', space=sflag, size = 0x8, scoped, tag = 'scoped memory for attention_pallas.1']
    #allocation4 [shape = 'u8[32768]{0}', space=vmem, size = 0x8000, scoped, tag = 'output window, operand 1']
    #allocation5 [shape = 's32[2]{0}', space=sflag, size = 0x8, scoped, tag = 'scoped memory for attention_pallas.1']
    %11 = vsyncpa [#allocation3], 0
    %s12 = scalar_lea.sflag [#allocation3], 1
    %13 = vsyncpa %s12, 0
    %14 = vsyncpa [#allocation5], 0
    %s15 = scalar_lea.sflag [#allocation5], 1
    %16 = vsyncpa %s15, 0
    loop: start=0, step=1, limit=4
    $region2: #{attention_pallas.1} parent=1 // loop_pre_header
      _
    $region3: #{attention_pallas.1} parent=1 // loop_header
      %s18 = sphi 0, %s22
      %p19 = scmp.ge.s32.totalorder %s18, 4
      %s28 = sphi 0, %s30
      %s31 = sphi 0, %s28
      %s32 = sphi 0, %s31
      %s48 = sphi 0, %s32
      %s52 = sphi 0, %s52
      %s54 = sphi 0, %s52
      %s55 = sphi 0, %s54
      %s69 = sphi 0, %s55
      %s73 = sphi 0, %s73
      %s75 = sphi 0, %s73
      %s76 = sphi 0, %s75
      %s90 = sphi 0, %s76
      %s94 = sphi 0, %s94
      %s96 = sphi 0, %s94
      %s97 = sphi 0, %s96
      %s111 = sphi 0, %s97
      %s117 = sphi 0, %s119
      %s120 = sphi 0, %s117
      %s121 = sphi 0, %s120
      %s137 = sphi 0, %s121
      %s143 = sphi 0, %s145
      %s146 = sphi 0, %s143
      %s147 = sphi 0, %s146
      %s163 = sphi 0, %s147
    $region4: #{attention_pallas.1} parent=1 // loop_header_branch
      %21 = sbr.rel (%p19) target = $region8
    $region5: #{attention_pallas.1} parent=1 // loop_body
      %s23 = ssub.s32 %s18, 1
      %s24 = ssub.s32 %s18, 2
      %s25 = sadd.s32 %s18, 1
      %s26 = ssub.s32 %s18, %s25
      %p27 = scmp.eq.s32.totalorder %s26, 0
      %s29 = sadd.s32 %s28, 1
      %s30 = scalar_select %p27, %s28, %s29
      %p33 = pneg %p27
      %p34 = scmp.eq.s32.totalorder %s18, 1
      %p35 = por %p33, %p34
      %p36 = scmp.ne.s32.totalorder %s28, %s31
      %p37 = scmp.eq.s32.totalorder %s18, 0
      %p38 = por %p36, %p37
      %p39 = scmp.ne.s32.totalorder %s28, %s31
      %p40 = scmp.eq.s32.totalorder %s23, 1
      %p41 = por %p39, %p40
      %p42 = scmp.ne.s32.totalorder %s31, %s32
      %p43 = scmp.eq.s32.totalorder %s23, 0
      %p44 = por %p42, %p43
      %p45 = scmp.ne.s32.totalorder %s31, %s32
      %p46 = scmp.eq.s32.totalorder %s24, 1
      %p47 = por %p45, %p46
      %p49 = scmp.ne.s32.totalorder %s32, %s48
      %p50 = scmp.eq.s32.totalorder %s24, 0
      %p51 = por %p49, %p50
      %s53 = sadd.s32 %s52, 1
      %p56 = scmp.eq.s32.totalorder %s18, 1
      %p57 = scmp.ne.s32.totalorder %s52, %s54
      %p58 = scmp.eq.s32.totalorder %s18, 0
      %p59 = por %p57, %p58
      %p60 = scmp.ne.s32.totalorder %s52, %s54
      %p61 = scmp.eq.s32.totalorder %s23, 1
      %p62 = por %p60, %p61
      %p63 = scmp.ne.s32.totalorder %s54, %s55
      %p64 = scmp.eq.s32.totalorder %s23, 0
      %p65 = por %p63, %p64
      %p66 = scmp.ne.s32.totalorder %s54, %s55
      %p67 = scmp.eq.s32.totalorder %s24, 1
      %p68 = por %p66, %p67
      %p70 = scmp.ne.s32.totalorder %s55, %s69
      %p71 = scmp.eq.s32.totalorder %s24, 0
      %p72 = por %p70, %p71
      %s74 = sadd.s32 %s73, 1
      %p77 = scmp.eq.s32.totalorder %s18, 1
      %p78 = scmp.ne.s32.totalorder %s73, %s75
      %p79 = scmp.eq.s32.totalorder %s18, 0
      %p80 = por %p78, %p79
      %p81 = scmp.ne.s32.totalorder %s73, %s75
      %p82 = scmp.eq.s32.totalorder %s23, 1
      %p83 = por %p81, %p82
      %p84 = scmp.ne.s32.totalorder %s75, %s76
      %p85 = scmp.eq.s32.totalorder %s23, 0
      %p86 = por %p84, %p85
      %p87 = scmp.ne.s32.totalorder %s75, %s76
      %p88 = scmp.eq.s32.totalorder %s24, 1
      %p89 = por %p87, %p88
      %p91 = scmp.ne.s32.totalorder %s76, %s90
      %p92 = scmp.eq.s32.totalorder %s24, 0
      %p93 = por %p91, %p92
      %s95 = sadd.s32 %s94, 1
      %p98 = scmp.eq.s32.totalorder %s18, 1
      %p99 = scmp.ne.s32.totalorder %s94, %s96
      %p100 = scmp.eq.s32.totalorder %s18, 0
      %p101 = por %p99, %p100
      %p102 = scmp.ne.s32.totalorder %s94, %s96
      %p103 = scmp.eq.s32.totalorder %s23, 1
      %p104 = por %p102, %p103
      %p105 = scmp.ne.s32.totalorder %s96, %s97
      %p106 = scmp.eq.s32.totalorder %s23, 0
      %p107 = por %p105, %p106
      %p108 = scmp.ne.s32.totalorder %s96, %s97
      %p109 = scmp.eq.s32.totalorder %s24, 1
      %p110 = por %p108, %p109
      %p112 = scmp.ne.s32.totalorder %s97, %s111
      %p113 = scmp.eq.s32.totalorder %s24, 0
      %p114 = por %p112, %p113
      %s115 = ssub.s32 %s18, %s25
      %p116 = scmp.eq.s32.totalorder %s115, 0
      %s118 = sadd.s32 %s117, 1
      %s119 = scalar_select %p116, %s117, %s118
      %p122 = pneg %p116
      %p123 = scmp.eq.s32.totalorder %s18, 1
      %p124 = por %p122, %p123
      %p125 = scmp.ne.s32.totalorder %s117, %s120
      %p126 = scmp.eq.s32.totalorder %s18, 0
      %p127 = por %p125, %p126
      %p128 = scmp.ne.s32.totalorder %s117, %s120
      %p129 = scmp.eq.s32.totalorder %s23, 1
      %p130 = por %p128, %p129
      %p131 = scmp.ne.s32.totalorder %s120, %s121
      %p132 = scmp.eq.s32.totalorder %s23, 0
      %p133 = por %p131, %p132
      %p134 = scmp.ne.s32.totalorder %s120, %s121
      %p135 = scmp.eq.s32.totalorder %s24, 1
      %p136 = por %p134, %p135
      %p138 = scmp.ne.s32.totalorder %s121, %s137
      %p139 = scmp.eq.s32.totalorder %s24, 0
      %p140 = por %p138, %p139
      %s141 = ssub.s32 %s18, %s25
      %p142 = scmp.eq.s32.totalorder %s141, 0
      %s144 = sadd.s32 %s143, 1
      %s145 = scalar_select %p142, %s143, %s144
      %p148 = pneg %p142
      %p149 = scmp.eq.s32.totalorder %s18, 1
      %p150 = por %p148, %p149
      %p151 = scmp.ne.s32.totalorder %s143, %s146
      %p152 = scmp.eq.s32.totalorder %s18, 0
      %p153 = por %p151, %p152
      %p154 = scmp.ne.s32.totalorder %s143, %s146
      %p155 = scmp.eq.s32.totalorder %s23, 1
      %p156 = por %p154, %p155
      %p157 = scmp.ne.s32.totalorder %s146, %s147
      %p158 = scmp.eq.s32.totalorder %s23, 0
      %p159 = por %p157, %p158
      %p160 = scmp.ne.s32.totalorder %s146, %s147
      %p161 = scmp.eq.s32.totalorder %s24, 1
      %p162 = por %p160, %p161
      %p164 = scmp.ne.s32.totalorder %s147, %s163
      %p165 = scmp.eq.s32.totalorder %s24, 0
      %p166 = por %p164, %p165
      %p167 = scmp.le.s32.totalorder 1, %s18
      %p168 = scmp.lt.s32.totalorder %s18, 3
      %p169 = pnand %p167, %p168
      %p170 = pneg %p169
      // Predicated region
      $region9: #{attention_pallas.1} parent=5 // pred_check
        _
      $region10: #{attention_pallas.1} parent=5 // pred_check_branch
        %172 = sbr.rel (%p169) target = $region12
      $region11: #{attention_pallas.1} parent=5 // pred_region
        %s173 = ssub.s32 %s18, 1
        // Predicated region
        $region13: #{attention_pallas.1} parent=11 // pred_check
          %p174 = pneg %p65
        $region14: #{attention_pallas.1} parent=11 // pred_check_branch
          %176 = sbr.rel (%p174) target = $region16
        $region15: #{attention_pallas.1} parent=11 // pred_region
          _
        $region16: #{attention_pallas.1} parent=11 // pred_fallthru
          _
        // Predicated region
        $region17: #{attention_pallas.1} parent=11 // pred_check
          %p177 = pneg %p86
        $region18: #{attention_pallas.1} parent=11 // pred_check_branch
          %179 = sbr.rel (%p177) target = $region20
        $region19: #{attention_pallas.1} parent=11 // pred_region
          _
        $region20: #{attention_pallas.1} parent=11 // pred_fallthru
          _
        // Predicated region
        $region21: #{attention_pallas.1} parent=11 // pred_check
          %p180 = pneg %p107
        $region22: #{attention_pallas.1} parent=11 // pred_check_branch
          %182 = sbr.rel (%p180) target = $region24
        $region23: #{attention_pallas.1} parent=11 // pred_region
          _
        $region24: #{attention_pallas.1} parent=11 // pred_fallthru
          _
      $region12: #{attention_pallas.1} parent=5 // pred_fallthru
        _
      %p183 = scmp.lt.s32.totalorder %s18, 2
      // Predicated region
      $region25: #{attention_pallas.1} parent=5 // pred_check
        %p184 = pneg %p183
      $region26: #{attention_pallas.1} parent=5 // pred_check_branch
        %186 = sbr.rel (%p184) target = $region28
      $region27: #{attention_pallas.1} parent=5 // pred_region
        // Predicated region
        $region29: #{attention_pallas.1} parent=27 // pred_check
          %p187 = pneg %p38
        $region30: #{attention_pallas.1} parent=27 // pred_check_branch
          %189 = sbr.rel (%p187) target = $region32
        $region31: #{attention_pallas.1} parent=27 // pred_region
          %p190 = scmp.lt.s32.totalorder %s18, 1
          %s191 = scalar_select %p190, %s18, 1
          %s192 = smul.addr %s191, 8
          %s193 = scalar_lea.vmem %s0, %s192
        $region32: #{attention_pallas.1} parent=27 // pred_fallthru
          _
      $region28: #{attention_pallas.1} parent=5 // pred_fallthru
        _
      %p194 = scmp.le.s32.totalorder 1, %s18
      %p195 = scmp.lt.s32.totalorder %s18, 3
      %p196 = pnand %p194, %p195
      %p197 = pneg %p196
      // Predicated region
      $region33: #{attention_pallas.1} parent=5 // pred_check
        _
      $region34: #{attention_pallas.1} parent=5 // pred_check_branch
        %199 = sbr.rel (%p196) target = $region36
      $region35: #{attention_pallas.1} parent=5 // pred_region
        %s200 = ssub.s32 %s18, 1
        %p201 = scmp.lt.s32.totalorder %s23, 1
        %s202 = scalar_select %p201, %s23, 1
        %s203 = smul.addr %s202, 8
        %s204 = scalar_lea.vmem %s0, %s203
        %p205 = pneg %p44
        %p206 = pneg %p41
        %p207 = pneg %p65
        %p208 = pneg %p62
        %p209 = pneg %p86
        %p210 = pneg %p83
        %p211 = pneg %p107
        %p212 = pneg %p104
        %p213 = pneg %p133
        %p214 = pneg %p130
        %s215 = sand.u32 %s120, 1
        %s216 = scalar_lea.sflag [#allocation3], %s215
        %s217 = sand.u32 %s120, 1
        %s218 = smul.addr %s217, 8
        %s219 = scalar_lea.vmem [#allocation2], %s218
        %p220 = pneg %p159
        %p221 = pneg %p156
        %s222 = sand.u32 %s146, 1
        %s223 = scalar_lea.sflag [#allocation5], %s222
        %s224 = sand.u32 %s146, 1
        %s225 = smul.addr %s224, 32
        %s226 = scalar_lea.vmem [#allocation4], %s225
        %p227 = scmp.lt.s32.totalorder %s23, 1
        %s228 = scalar_select %p227, %s23, 1
        %s229 = smul.addr %s228, 8
        %s230 = scalar_lea.vmem %s0, %s229
        %v231 = vld [vmem:[%s230] sm:$0xff]
        %v232 = vld [vmem:[%s1] sm:$0xff]
        %v233 = vld [vmem:[%s1 + $0x8] sm:$0xff]
        %v234 = vld [vmem:[%s1 + $0x10] sm:$0xff]
        %v235 = vld [vmem:[%s1 + $0x18] sm:$0xff]
        %vm236 = vcmask 261120
        %v238 = vsel %vm236, %v231, 0
        %v241 = vsel %vm236, %v232, 0
        %v244 = vsel %vm236, %v233, 0
        %v247 = vsel %vm236, %v234, 0
        %v250 = vsel %vm236, %v235, 0
        %252 = vmatprep.subr.mxu0 0.0
        %253 = vmatpush1.xpose.msra.mxu0 %v241
        %254 = vmatprep.subr.mxu0 0.0
        %255 = vmatpush1.xpose.msra.mxu0 %v244
        %256 = vmatprep.subr.mxu0 0.0
        %257 = vmatpush1.xpose.msra.mxu0 %v247
        %258 = vmatprep.subr.mxu0 0.0
        %259 = vmatpush1.xpose.msra.mxu0 %v250
        %260 = vmatprep.subr.mxu0 0.0
        %261 = vmatpush1.xpose.msra.mxu0 0.0
        %262 = vmatprep.subr.mxu0 0.0
        %263 = vmatpush1.xpose.msra.mxu0 0.0
        %264 = vmatprep.subr.mxu0 0.0
        %265 = vmatpush1.xpose.msra.mxu0 0.0
        %266 = vmatprep.subr.mxu0 0.0
        %267 = vmatpush1.xpose.msra.mxu0 0.0
        %268 = vmatprep.subr.mxu0 0.0
        %269 = vmatpush1.xpose.msra.mxu0 0.0
        %270 = vmatprep.subr.mxu0 0.0
        %271 = vmatpush1.xpose.msra.mxu0 0.0
        %272 = vmatprep.subr.mxu0 0.0
        %273 = vmatpush1.xpose.msra.mxu0 0.0
        %274 = vmatprep.subr.mxu0 0.0
        %275 = vmatpush1.xpose.msra.mxu0 0.0
        %276 = vmatprep.subr.mxu0 0.0
        %277 = vmatpush1.xpose.msra.mxu0 0.0
        %278 = vmatprep.subr.mxu0 0.0
        %279 = vmatpush1.xpose.msra.mxu0 0.0
        %280 = vmatprep.subr.mxu0 0.0
        %281 = vmatpush1.xpose.msra.mxu0 0.0
        %282 = vmatprep.subr.mxu0 0.0
        %283 = vmatpush1.xpose.msra.mxu0 0.0
        %284 = vmatprep.subr.mxu0 0.0
        %285 = vmatpush1.xpose.msra.mxu0 0.0
        %286 = vmatprep.subr.mxu0 0.0
        %287 = vmatpush1.xpose.msra.mxu0 0.0
        %288 = vmatprep.subr.mxu0 0.0
        %289 = vmatpush1.xpose.msra.mxu0 0.0
        %290 = vmatprep.subr.mxu0 0.0
        %291 = vmatpush1.xpose.msra.mxu0 0.0
        %292 = vmatprep.subr.mxu0 0.0
        %293 = vmatpush1.xpose.msra.mxu0 0.0
        %294 = vmatprep.subr.mxu0 0.0
        %295 = vmatpush1.xpose.msra.mxu0 0.0
        %296 = vmatprep.subr.mxu0 0.0
        %297 = vmatpush1.xpose.msra.mxu0 0.0
        %298 = vmatprep.subr.mxu0 0.0
        %299 = vmatpush1.xpose.msra.mxu0 0.0
        %300 = vmatprep.subr.mxu0 0.0
        %301 = vmatpush1.xpose.msra.mxu0 0.0
        %302 = vmatprep.subr.mxu0 0.0
        %303 = vmatpush1.xpose.msra.mxu0 0.0
        %304 = vmatprep.subr.mxu0 0.0
        %305 = vmatpush1.xpose.msra.mxu0 0.0
        %306 = vmatprep.subr.mxu0 0.0
        %307 = vmatpush1.xpose.msra.mxu0 0.0
        %308 = vmatprep.subr.mxu0 0.0
        %309 = vmatpush1.xpose.msra.mxu0 0.0
        %310 = vmatprep.subr.mxu0 0.0
        %311 = vmatpush1.xpose.msra.mxu0 0.0
        %312 = vmatprep.subr.mxu0 0.0
        %313 = vmatpush1.xpose.msra.mxu0 0.0
        %314 = vmatprep.subr.mxu0 0.0
        %315 = vmatpush1.xpose.msra.mxu0 0.0
        %316 = vmatprep.mubr.f32.mxu0 0.0
        %317 = vmatmul.mubr.f32.gmra.mrb[0].mxu0 %v238
        %v318 = vpop.f32.mrb[0].mxu0
        %v319 = vadd.f32 0.0, %v318
        %v320 = vpop.f32.mrb[0].mxu0
        %321 = vdwg.mxu0
        %s322 = scalar_lea.vmem %s1, 32
        %v323 = vld [vmem:[%s322] sm:$0xff]
        %v324 = vld [vmem:[%s322 + $0x8] sm:$0xff]
        %v325 = vld [vmem:[%s322 + $0x10] sm:$0xff]
        %v326 = vld [vmem:[%s322 + $0x18] sm:$0xff]
        %v328 = vsel %vm236, %v323, 0
        %v331 = vsel %vm236, %v324, 0
        %v334 = vsel %vm236, %v325, 0
        %v337 = vsel %vm236, %v326, 0
        %339 = vmatprep.subr.mxu0 0.0
        %340 = vmatpush1.xpose.msra.mxu0 %v328
        %341 = vmatprep.subr.mxu0 0.0
        %342 = vmatpush1.xpose.msra.mxu0 %v331
        %343 = vmatprep.subr.mxu0 0.0
        %344 = vmatpush1.xpose.msra.mxu0 %v334
        %345 = vmatprep.subr.mxu0 0.0
        %346 = vmatpush1.xpose.msra.mxu0 %v337
        %347 = vmatprep.subr.mxu0 0.0
        %348 = vmatpush1.xpose.msra.mxu0 0.0
        %349 = vmatprep.subr.mxu0 0.0
        %350 = vmatpush1.xpose.msra.mxu0 0.0
        %351 = vmatprep.subr.mxu0 0.0
        %352 = vmatpush1.xpose.msra.mxu0 0.0
        %353 = vmatprep.subr.mxu0 0.0
        %354 = vmatpush1.xpose.msra.mxu0 0.0
        %355 = vmatprep.subr.mxu0 0.0
        %356 = vmatpush1.xpose.msra.mxu0 0.0
        %357 = vmatprep.subr.mxu0 0.0
        %358 = vmatpush1.xpose.msra.mxu0 0.0
        %359 = vmatprep.subr.mxu0 0.0
        %360 = vmatpush1.xpose.msra.mxu0 0.0
        %361 = vmatprep.subr.mxu0 0.0
        %362 = vmatpush1.xpose.msra.mxu0 0.0
        %363 = vmatprep.subr.mxu0 0.0
        %364 = vmatpush1.xpose.msra.mxu0 0.0
        %365 = vmatprep.subr.mxu0 0.0
        %366 = vmatpush1.xpose.msra.mxu0 0.0
        %367 = vmatprep.subr.mxu0 0.0
        %368 = vmatpush1.xpose.msra.mxu0 0.0
        %369 = vmatprep.subr.mxu0 0.0
        %370 = vmatpush1.xpose.msra.mxu0 0.0
        %371 = vmatprep.subr.mxu0 0.0
        %372 = vmatpush1.xpose.msra.mxu0 0.0
        %373 = vmatprep.subr.mxu0 0.0
        %374 = vmatpush1.xpose.msra.mxu0 0.0
        %375 = vmatprep.subr.mxu0 0.0
        %376 = vmatpush1.xpose.msra.mxu0 0.0
        %377 = vmatprep.subr.mxu0 0.0
        %378 = vmatpush1.xpose.msra.mxu0 0.0
        %379 = vmatprep.subr.mxu0 0.0
        %380 = vmatpush1.xpose.msra.mxu0 0.0
        %381 = vmatprep.subr.mxu0 0.0
        %382 = vmatpush1.xpose.msra.mxu0 0.0
        %383 = vmatprep.subr.mxu0 0.0
        %384 = vmatpush1.xpose.msra.mxu0 0.0
        %385 = vmatprep.subr.mxu0 0.0
        %386 = vmatpush1.xpose.msra.mxu0 0.0
        %387 = vmatprep.subr.mxu0 0.0
        %388 = vmatpush1.xpose.msra.mxu0 0.0
        %389 = vmatprep.subr.mxu0 0.0
        %390 = vmatpush1.xpose.msra.mxu0 0.0
        %391 = vmatprep.subr.mxu0 0.0
        %392 = vmatpush1.xpose.msra.mxu0 0.0
        %393 = vmatprep.subr.mxu0 0.0
        %394 = vmatpush1.xpose.msra.mxu0 0.0
        %395 = vmatprep.subr.mxu0 0.0
        %396 = vmatpush1.xpose.msra.mxu0 0.0
        %397 = vmatprep.subr.mxu0 0.0
        %398 = vmatpush1.xpose.msra.mxu0 0.0
        %399 = vmatprep.subr.mxu0 0.0
        %400 = vmatpush1.xpose.msra.mxu0 0.0
        %401 = vmatprep.subr.mxu0 0.0
        %402 = vmatpush1.xpose.msra.mxu0 0.0
        %403 = vmatprep.mubr.f32.mxu0 0.0
        %404 = vmatmul.mubr.f32.gmra.mrb[0].mxu0 %v238
        %v405 = vpop.f32.mrb[0].mxu0
        %v406 = vadd.f32 0.0, %v405
        %v407 = vpop.f32.mrb[0].mxu0
        %408 = vdwg.mxu0
        %s409 = scalar_lea.vmem %s1, 64
        %v410 = vld [vmem:[%s409] sm:$0xff]
        %v411 = vld [vmem:[%s409 + $0x8] sm:$0xff]
        %v412 = vld [vmem:[%s409 + $0x10] sm:$0xff]
        %v413 = vld [vmem:[%s409 + $0x18] sm:$0xff]
        %v415 = vsel %vm236, %v410, 0
        %v418 = vsel %vm236, %v411, 0
        %v421 = vsel %vm236, %v412, 0
        %v424 = vsel %vm236, %v413, 0
        %426 = vmatprep.subr.mxu0 0.0
        %427 = vmatpush1.xpose.msra.mxu0 %v415
        %428 = vmatprep.subr.mxu0 0.0
        %429 = vmatpush1.xpose.msra.mxu0 %v418
        %430 = vmatprep.subr.mxu0 0.0
        %431 = vmatpush1.xpose.msra.mxu0 %v421
        %432 = vmatprep.subr.mxu0 0.0
        %433 = vmatpush1.xpose.msra.mxu0 %v424
        %434 = vmatprep.subr.mxu0 0.0
        %435 = vmatpush1.xpose.msra.mxu0 0.0
        %436 = vmatprep.subr.mxu0 0.0
        %437 = vmatpush1.xpose.msra.mxu0 0.0
        %438 = vmatprep.subr.mxu0 0.0
        %439 = vmatpush1.xpose.msra.mxu0 0.0
        %440 = vmatprep.subr.mxu0 0.0
        %441 = vmatpush1.xpose.msra.mxu0 0.0
        %442 = vmatprep.subr.mxu0 0.0
        %443 = vmatpush1.xpose.msra.mxu0 0.0
        %444 = vmatprep.subr.mxu0 0.0
        %445 = vmatpush1.xpose.msra.mxu0 0.0
        %446 = vmatprep.subr.mxu0 0.0
        %447 = vmatpush1.xpose.msra.mxu0 0.0
        %448 = vmatprep.subr.mxu0 0.0
        %449 = vmatpush1.xpose.msra.mxu0 0.0
        %450 = vmatprep.subr.mxu0 0.0
        %451 = vmatpush1.xpose.msra.mxu0 0.0
        %452 = vmatprep.subr.mxu0 0.0
        %453 = vmatpush1.xpose.msra.mxu0 0.0
        %454 = vmatprep.subr.mxu0 0.0
        %455 = vmatpush1.xpose.msra.mxu0 0.0
        %456 = vmatprep.subr.mxu0 0.0
        %457 = vmatpush1.xpose.msra.mxu0 0.0
        %458 = vmatprep.subr.mxu0 0.0
        %459 = vmatpush1.xpose.msra.mxu0 0.0
        %460 = vmatprep.subr.mxu0 0.0
        %461 = vmatpush1.xpose.msra.mxu0 0.0
        %462 = vmatprep.subr.mxu0 0.0
        %463 = vmatpush1.xpose.msra.mxu0 0.0
        %464 = vmatprep.subr.mxu0 0.0
        %465 = vmatpush1.xpose.msra.mxu0 0.0
        %466 = vmatprep.subr.mxu0 0.0
        %467 = vmatpush1.xpose.msra.mxu0 0.0
        %468 = vmatprep.subr.mxu0 0.0
        %469 = vmatpush1.xpose.msra.mxu0 0.0
        %470 = vmatprep.subr.mxu0 0.0
        %471 = vmatpush1.xpose.msra.mxu0 0.0
        %472 = vmatprep.subr.mxu0 0.0
        %473 = vmatpush1.xpose.msra.mxu0 0.0
        %474 = vmatprep.subr.mxu0 0.0
        %475 = vmatpush1.xpose.msra.mxu0 0.0
        %476 = vmatprep.subr.mxu0 0.0
        %477 = vmatpush1.xpose.msra.mxu0 0.0
        %478 = vmatprep.subr.mxu0 0.0
        %479 = vmatpush1.xpose.msra.mxu0 0.0
        %480 = vmatprep.subr.mxu0 0.0
        %481 = vmatpush1.xpose.msra.mxu0 0.0
        %482 = vmatprep.subr.mxu0 0.0
        %483 = vmatpush1.xpose.msra.mxu0 0.0
        %484 = vmatprep.subr.mxu0 0.0
        %485 = vmatpush1.xpose.msra.mxu0 0.0
        %486 = vmatprep.subr.mxu0 0.0
        %487 = vmatpush1.xpose.msra.mxu0 0.0
        %488 = vmatprep.subr.mxu0 0.0
        %489 = vmatpush1.xpose.msra.mxu0 0.0
        %490 = vmatprep.mubr.f32.mxu0 0.0
        %491 = vmatmul.mubr.f32.gmra.mrb[0].mxu0 %v238
        %v492 = vpop.f32.mrb[0].mxu0
        %v493 = vadd.f32 0.0, %v492
        %v494 = vpop.f32.mrb[0].mxu0
        %495 = vdwg.mxu0
        %vm496 = vcmask 64512
        %v498 = vsel %vm496, %v319, 0
        %v501 = vsel %vm496, %v406, 0
        %503 = vmatprep.subr.mxu0 0.0
        %504 = vmatpush1.xpose.msra.mxu0 %v501
        %505 = vmatprep.subr.mxu0 0.0
        %506 = vmatpush1.xpose.msra.mxu0 0.0
        %507 = vmatprep.subr.mxu0 0.0
        %508 = vmatpush1.xpose.msra.mxu0 0.0
        %509 = vmatprep.subr.mxu0 0.0
        %510 = vmatpush1.xpose.msra.mxu0 0.0
        %511 = vmatprep.subr.mxu0 0.0
        %512 = vmatpush1.xpose.msra.mxu0 0.0
        %513 = vmatprep.subr.mxu0 0.0
        %514 = vmatpush1.xpose.msra.mxu0 0.0
        %515 = vmatprep.subr.mxu0 0.0
        %516 = vmatpush1.xpose.msra.mxu0 0.0
        %517 = vmatprep.subr.mxu0 0.0
        %518 = vmatpush1.xpose.msra.mxu0 0.0
        %519 = vmatprep.subr.mxu0 0.0
        %520 = vmatpush1.xpose.msra.mxu0 0.0
        %521 = vmatprep.subr.mxu0 0.0
        %522 = vmatpush1.xpose.msra.mxu0 0.0
        %523 = vmatprep.subr.mxu0 0.0
        %524 = vmatpush1.xpose.msra.mxu0 0.0
        %525 = vmatprep.subr.mxu0 0.0
        %526 = vmatpush1.xpose.msra.mxu0 0.0
        %527 = vmatprep.subr.mxu0 0.0
        %528 = vmatpush1.xpose.msra.mxu0 0.0
        %529 = vmatprep.subr.mxu0 0.0
        %530 = vmatpush1.xpose.msra.mxu0 0.0
        %531 = vmatprep.subr.mxu0 0.0
        %532 = vmatpush1.xpose.msra.mxu0 0.0
        %533 = vmatprep.subr.mxu0 0.0
        %534 = vmatpush1.xpose.msra.mxu0 0.0
        %535 = vmatprep.subr.mxu0 0.0
        %536 = vmatpush1.xpose.msra.mxu0 0.0
        %537 = vmatprep.subr.mxu0 0.0
        %538 = vmatpush1.xpose.msra.mxu0 0.0
        %539 = vmatprep.subr.mxu0 0.0
        %540 = vmatpush1.xpose.msra.mxu0 0.0
        %541 = vmatprep.subr.mxu0 0.0
        %542 = vmatpush1.xpose.msra.mxu0 0.0
        %543 = vmatprep.subr.mxu0 0.0
        %544 = vmatpush1.xpose.msra.mxu0 0.0
        %545 = vmatprep.subr.mxu0 0.0
        %546 = vmatpush1.xpose.msra.mxu0 0.0
        %547 = vmatprep.subr.mxu0 0.0
        %548 = vmatpush1.xpose.msra.mxu0 0.0
        %549 = vmatprep.subr.mxu0 0.0
        %550 = vmatpush1.xpose.msra.mxu0 0.0
        %551 = vmatprep.subr.mxu0 0.0
        %552 = vmatpush1.xpose.msra.mxu0 0.0
        %553 = vmatprep.subr.mxu0 0.0
        %554 = vmatpush1.xpose.msra.mxu0 0.0
        %555 = vmatprep.subr.mxu0 0.0
        %556 = vmatpush1.xpose.msra.mxu0 0.0
        %557 = vmatprep.subr.mxu0 0.0
        %558 = vmatpush1.xpose.msra.mxu0 0.0
        %559 = vmatprep.subr.mxu0 0.0
        %560 = vmatpush1.xpose.msra.mxu0 0.0
        %561 = vmatprep.subr.mxu0 0.0
        %562 = vmatpush1.xpose.msra.mxu0 0.0
        %563 = vmatprep.subr.mxu0 0.0
        %564 = vmatpush1.xpose.msra.mxu0 0.0
        %565 = vmatprep.subr.mxu0 0.0
        %566 = vmatpush1.xpose.msra.mxu0 0.0
        %567 = vmatprep.mubr.f32.mxu0 0.0
        %568 = vmatmul.mubr.f32.gmra.mrb[0].mxu0 %v498
        %v569 = vpop.f32.mrb[0].mxu0
        %v570 = vadd.f32 0.0, %v569
        %v571 = vpop.f32.mrb[0].mxu0
        %572 = vdwg.mxu0
        %v573 = vsel %vm496, %v570, -inf
        %574 = vmax.xlane.f32.xlu0 %v573
        %v575 = vpop.xlane.xlu0 %574
        %v576 = vsub.f32 %v570, %v575
        %v577 = vmul.f32 %v576, 1.442695
        %v578 = vpow.pop %v577
        %v579 = vsel %vm496, %v578, 0.0
        %580 = vadd.xlane.f32.xlu0 %v579
        %v581 = vpop.xlane.xlu0 %580
        %v582 = vrcp.pop %v581
        %v583 = vmul.f32 %v578, %v582
        %584 = vst.msk [vmem:[%s226] sm:$0xff] %vm496, %v583
        %v586 = vsel %vm496, %v583, 0
        %588 = vmatprep.subr.mxu0 0.0
        %589 = vmatpush1.msra.mxu0 %v493
        %590 = vmatprep.subr.mxu0 0.0
        %591 = vmatpush1.msra.mxu0 0.0
        %592 = vmatprep.subr.mxu0 0.0
        %593 = vmatpush1.msra.mxu0 0.0
        %594 = vmatprep.subr.mxu0 0.0
        %595 = vmatpush1.msra.mxu0 0.0
        %596 = vmatprep.subr.mxu0 0.0
        %597 = vmatpush1.msra.mxu0 0.0
        %598 = vmatprep.subr.mxu0 0.0
        %599 = vmatpush1.msra.mxu0 0.0
        %600 = vmatprep.subr.mxu0 0.0
        %601 = vmatpush1.msra.mxu0 0.0
        %602 = vmatprep.subr.mxu0 0.0
        %603 = vmatpush1.msra.mxu0 0.0
        %604 = vmatprep.subr.mxu0 0.0
        %605 = vmatpush1.msra.mxu0 0.0
        %606 = vmatprep.subr.mxu0 0.0
        %607 = vmatpush1.msra.mxu0 0.0
        %608 = vmatprep.subr.mxu0 0.0
        %609 = vmatpush1.msra.mxu0 0.0
        %610 = vmatprep.subr.mxu0 0.0
        %611 = vmatpush1.msra.mxu0 0.0
        %612 = vmatprep.subr.mxu0 0.0
        %613 = vmatpush1.msra.mxu0 0.0
        %614 = vmatprep.subr.mxu0 0.0
        %615 = vmatpush1.msra.mxu0 0.0
        %616 = vmatprep.subr.mxu0 0.0
        %617 = vmatpush1.msra.mxu0 0.0
        %618 = vmatprep.subr.mxu0 0.0
        %619 = vmatpush1.msra.mxu0 0.0
        %620 = vmatprep.subr.mxu0 0.0
        %621 = vmatpush1.msra.mxu0 0.0
        %622 = vmatprep.subr.mxu0 0.0
        %623 = vmatpush1.msra.mxu0 0.0
        %624 = vmatprep.subr.mxu0 0.0
        %625 = vmatpush1.msra.mxu0 0.0
        %626 = vmatprep.subr.mxu0 0.0
        %627 = vmatpush1.msra.mxu0 0.0
        %628 = vmatprep.subr.mxu0 0.0
        %629 = vmatpush1.msra.mxu0 0.0
        %630 = vmatprep.subr.mxu0 0.0
        %631 = vmatpush1.msra.mxu0 0.0
        %632 = vmatprep.subr.mxu0 0.0
        %633 = vmatpush1.msra.mxu0 0.0
        %634 = vmatprep.subr.mxu0 0.0
        %635 = vmatpush1.msra.mxu0 0.0
        %636 = vmatprep.subr.mxu0 0.0
        %637 = vmatpush1.msra.mxu0 0.0
        %638 = vmatprep.subr.mxu0 0.0
        %639 = vmatpush1.msra.mxu0 0.0
        %640 = vmatprep.subr.mxu0 0.0
        %641 = vmatpush1.msra.mxu0 0.0
        %642 = vmatprep.subr.mxu0 0.0
        %643 = vmatpush1.msra.mxu0 0.0
        %644 = vmatprep.subr.mxu0 0.0
        %645 = vmatpush1.msra.mxu0 0.0
        %646 = vmatprep.subr.mxu0 0.0
        %647 = vmatpush1.msra.mxu0 0.0
        %648 = vmatprep.subr.mxu0 0.0
        %649 = vmatpush1.msra.mxu0 0.0
        %650 = vmatprep.subr.mxu0 0.0
        %651 = vmatpush1.msra.mxu0 0.0
        %652 = vmatprep.mubr.f32.mxu0 0.0
        %653 = vmatmul.mubr.f32.gmra.mrb[0].mxu0 %v586
        %v654 = vpop.f32.mrb[0].mxu0
        %v655 = vadd.f32 0.0, %v654
        %v656 = vpop.f32.mrb[0].mxu0
        %657 = vdwg.mxu0
        %v658 = vld [vmem:[%s2] sm:$0xff]
        %659 = vrot.lane.b32.xlu0 %v319, 120
        %v660 = vpop.permute.xlu0 %659
        %661 = vrot.lane.b32.xlu0 %v406, 120
        %v662 = vpop.permute.xlu0 %661
        %v663 = vsel %vm496, %v660, 0
        %v665 = vsel %vm496, %v662, 0
        %667 = vmatprep.subr.mxu0 0.0
        %668 = vmatpush1.xpose.msra.mxu0 %v665
        %669 = vmatprep.subr.mxu0 0.0
        %670 = vmatpush1.xpose.msra.mxu0 0.0
        %671 = vmatprep.subr.mxu0 0.0
        %672 = vmatpush1.xpose.msra.mxu0 0.0
        %673 = vmatprep.subr.mxu0 0.0
        %674 = vmatpush1.xpose.msra.mxu0 0.0
        %675 = vmatprep.subr.mxu0 0.0
        %676 = vmatpush1.xpose.msra.mxu0 0.0
        %677 = vmatprep.subr.mxu0 0.0
        %678 = vmatpush1.xpose.msra.mxu0 0.0
        %679 = vmatprep.subr.mxu0 0.0
        %680 = vmatpush1.xpose.msra.mxu0 0.0
        %681 = vmatprep.subr.mxu0 0.0
        %682 = vmatpush1.xpose.msra.mxu0 0.0
        %683 = vmatprep.subr.mxu0 0.0
        %684 = vmatpush1.xpose.msra.mxu0 0.0
        %685 = vmatprep.subr.mxu0 0.0
        %686 = vmatpush1.xpose.msra.mxu0 0.0
        %687 = vmatprep.subr.mxu0 0.0
        %688 = vmatpush1.xpose.msra.mxu0 0.0
        %689 = vmatprep.subr.mxu0 0.0
        %690 = vmatpush1.xpose.msra.mxu0 0.0
        %691 = vmatprep.subr.mxu0 0.0
        %692 = vmatpush1.xpose.msra.mxu0 0.0
        %693 = vmatprep.subr.mxu0 0.0
        %694 = vmatpush1.xpose.msra.mxu0 0.0
        %695 = vmatprep.subr.mxu0 0.0
        %696 = vmatpush1.xpose.msra.mxu0 0.0
        %697 = vmatprep.subr.mxu0 0.0
        %698 = vmatpush1.xpose.msra.mxu0 0.0
        %699 = vmatprep.subr.mxu0 0.0
        %700 = vmatpush1.xpose.msra.mxu0 0.0
        %701 = vmatprep.subr.mxu0 0.0
        %702 = vmatpush1.xpose.msra.mxu0 0.0
        %703 = vmatprep.subr.mxu0 0.0
        %704 = vmatpush1.xpose.msra.mxu0 0.0
        %705 = vmatprep.subr.mxu0 0.0
        %706 = vmatpush1.xpose.msra.mxu0 0.0
        %707 = vmatprep.subr.mxu0 0.0
        %708 = vmatpush1.xpose.msra.mxu0 0.0
        %709 = vmatprep.subr.mxu0 0.0
        %710 = vmatpush1.xpose.msra.mxu0 0.0
        %711 = vmatprep.subr.mxu0 0.0
        %712 = vmatpush1.xpose.msra.mxu0 0.0
        %713 = vmatprep.subr.mxu0 0.0
        %714 = vmatpush1.xpose.msra.mxu0 0.0
        %715 = vmatprep.subr.mxu0 0.0
        %716 = vmatpush1.xpose.msra.mxu0 0.0
        %717 = vmatprep.subr.mxu0 0.0
        %718 = vmatpush1.xpose.msra.mxu0 0.0
        %719 = vmatprep.subr.mxu0 0.0
        %720 = vmatpush1.xpose.msra.mxu0 0.0
        %721 = vmatprep.subr.mxu0 0.0
        %722 = vmatpush1.xpose.msra.mxu0 0.0
        %723 = vmatprep.subr.mxu0 0.0
        %724 = vmatpush1.xpose.msra.mxu0 0.0
        %725 = vmatprep.subr.mxu0 0.0
        %726 = vmatpush1.xpose.msra.mxu0 0.0
        %727 = vmatprep.subr.mxu0 0.0
        %728 = vmatpush1.xpose.msra.mxu0 0.0
        %729 = vmatprep.subr.mxu0 0.0
        %730 = vmatpush1.xpose.msra.mxu0 0.0
        %731 = vmatprep.mubr.f32.mxu0 0.0
        %732 = vmatmul.mubr.f32.gmra.mrb[0].mxu0 %v663
        %v733 = vpop.f32.mrb[0].mxu0
        %v734 = vadd.f32 0.0, %v733
        %v735 = vpop.f32.mrb[0].mxu0
        %736 = vdwg.mxu0
        %v737 = vsel %vm496, %v734, -inf
        %738 = vmax.xlane.f32.xlu0 %v737
        %v739 = vpop.xlane.xlu0 %738
        %v740 = vsub.f32 %v734, %v739
        %v741 = vmul.f32 %v740, 1.442695
        %v742 = vpow.pop %v741
        %v743 = vsel %vm496, %v742, 0.0
        %744 = vadd.xlane.f32.xlu0 %v743
        %v745 = vpop.xlane.xlu0 %744
        %v746 = vrcp.pop %v745
        %v747 = vmul.f32 %v742, %v746
        %s748 = scalar_lea.vmem %s226, 8 [#allocation4]
        %749 = vst.msk [vmem:[%s748] sm:$0xff] %vm496, %v747
        %751 = vrot.lane.b32.xlu0 %v493, 120
        %v752 = vpop.permute.xlu0 %751
        %v755 = vsel %vm496, %v747, 0
        %757 = vmatprep.subr.mxu0 0.0
        %758 = vmatpush1.msra.mxu0 %v752
        %759 = vmatprep.subr.mxu0 0.0
        %760 = vmatpush1.msra.mxu0 0.0
        %761 = vmatprep.subr.mxu0 0.0
        %762 = vmatpush1.msra.mxu0 0.0
        %763 = vmatprep.subr.mxu0 0.0
        %764 = vmatpush1.msra.mxu0 0.0
        %765 = vmatprep.subr.mxu0 0.0
        %766 = vmatpush1.msra.mxu0 0.0
        %767 = vmatprep.subr.mxu0 0.0
        %768 = vmatpush1.msra.mxu0 0.0
        %769 = vmatprep.subr.mxu0 0.0
        %770 = vmatpush1.msra.mxu0 0.0
        %771 = vmatprep.subr.mxu0 0.0
        %772 = vmatpush1.msra.mxu0 0.0
        %773 = vmatprep.subr.mxu0 0.0
        %774 = vmatpush1.msra.mxu0 0.0
        %775 = vmatprep.subr.mxu0 0.0
        %776 = vmatpush1.msra.mxu0 0.0
        %777 = vmatprep.subr.mxu0 0.0
        %778 = vmatpush1.msra.mxu0 0.0
        %779 = vmatprep.subr.mxu0 0.0
        %780 = vmatpush1.msra.mxu0 0.0
        %781 = vmatprep.subr.mxu0 0.0
        %782 = vmatpush1.msra.mxu0 0.0
        %783 = vmatprep.subr.mxu0 0.0
        %784 = vmatpush1.msra.mxu0 0.0
        %785 = vmatprep.subr.mxu0 0.0
        %786 = vmatpush1.msra.mxu0 0.0
        %787 = vmatprep.subr.mxu0 0.0
        %788 = vmatpush1.msra.mxu0 0.0
        %789 = vmatprep.subr.mxu0 0.0
        %790 = vmatpush1.msra.mxu0 0.0
        %791 = vmatprep.subr.mxu0 0.0
        %792 = vmatpush1.msra.mxu0 0.0
        %793 = vmatprep.subr.mxu0 0.0
        %794 = vmatpush1.msra.mxu0 0.0
        %795 = vmatprep.subr.mxu0 0.0
        %796 = vmatpush1.msra.mxu0 0.0
        %797 = vmatprep.subr.mxu0 0.0
        %798 = vmatpush1.msra.mxu0 0.0
        %799 = vmatprep.subr.mxu0 0.0
        %800 = vmatpush1.msra.mxu0 0.0
        %801 = vmatprep.subr.mxu0 0.0
        %802 = vmatpush1.msra.mxu0 0.0
        %803 = vmatprep.subr.mxu0 0.0
        %804 = vmatpush1.msra.mxu0 0.0
        %805 = vmatprep.subr.mxu0 0.0
        %806 = vmatpush1.msra.mxu0 0.0
        %807 = vmatprep.subr.mxu0 0.0
        %808 = vmatpush1.msra.mxu0 0.0
        %809 = vmatprep.subr.mxu0 0.0
        %810 = vmatpush1.msra.mxu0 0.0
        %811 = vmatprep.subr.mxu0 0.0
        %812 = vmatpush1.msra.mxu0 0.0
        %813 = vmatprep.subr.mxu0 0.0
        %814 = vmatpush1.msra.mxu0 0.0
        %815 = vmatprep.subr.mxu0 0.0
        %816 = vmatpush1.msra.mxu0 0.0
        %817 = vmatprep.subr.mxu0 0.0
        %818 = vmatpush1.msra.mxu0 0.0
        %819 = vmatprep.subr.mxu0 0.0
        %820 = vmatpush1.msra.mxu0 0.0
        %821 = vmatprep.mubr.f32.mxu0 0.0
        %822 = vmatmul.mubr.f32.gmra.mrb[0].mxu0 %v755
        %v823 = vpop.f32.mrb[0].mxu0
        %v824 = vadd.f32 0.0, %v823
        %v825 = vpop.f32.mrb[0].mxu0
        %826 = vdwg.mxu0
        %s827 = scalar_lea.vmem %s2, 8
        %v828 = vld [vmem:[%s827] sm:$0xff]
        %v830 = vsel %vm496, %v824, 0
        %832 = vmatprep.subr.mxu0 0.0
        %833 = vmatpush1.msra.mxu0 %v828
        %834 = vmatprep.subr.mxu0 0.0
        %835 = vmatpush1.msra.mxu0 0.0
        %836 = vmatprep.subr.mxu0 0.0
        %837 = vmatpush1.msra.mxu0 0.0
        %838 = vmatprep.subr.mxu0 0.0
        %839 = vmatpush1.msra.mxu0 0.0
        %840 = vmatprep.subr.mxu0 0.0
        %841 = vmatpush1.msra.mxu0 0.0
        %842 = vmatprep.subr.mxu0 0.0
        %843 = vmatpush1.msra.mxu0 0.0
        %844 = vmatprep.subr.mxu0 0.0
        %845 = vmatpush1.msra.mxu0 0.0
        %846 = vmatprep.subr.mxu0 0.0
        %847 = vmatpush1.msra.mxu0 0.0
        %848 = vmatprep.subr.mxu0 0.0
        %849 = vmatpush1.msra.mxu0 0.0
        %850 = vmatprep.subr.mxu0 0.0
        %851 = vmatpush1.msra.mxu0 0.0
        %852 = vmatprep.subr.mxu0 0.0
        %853 = vmatpush1.msra.mxu0 0.0
        %854 = vmatprep.subr.mxu0 0.0
        %855 = vmatpush1.msra.mxu0 0.0
        %856 = vmatprep.subr.mxu0 0.0
        %857 = vmatpush1.msra.mxu0 0.0
        %858 = vmatprep.subr.mxu0 0.0
        %859 = vmatpush1.msra.mxu0 0.0
        %860 = vmatprep.subr.mxu0 0.0
        %861 = vmatpush1.msra.mxu0 0.0
        %862 = vmatprep.subr.mxu0 0.0
        %863 = vmatpush1.msra.mxu0 0.0
        %864 = vmatprep.subr.mxu0 0.0
        %865 = vmatpush1.msra.mxu0 0.0
        %866 = vmatprep.subr.mxu0 0.0
        %867 = vmatpush1.msra.mxu0 0.0
        %868 = vmatprep.subr.mxu0 0.0
        %869 = vmatpush1.msra.mxu0 0.0
        %870 = vmatprep.subr.mxu0 0.0
        %871 = vmatpush1.msra.mxu0 0.0
        %872 = vmatprep.subr.mxu0 0.0
        %873 = vmatpush1.msra.mxu0 0.0
        %874 = vmatprep.subr.mxu0 0.0
        %875 = vmatpush1.msra.mxu0 0.0
        %876 = vmatprep.subr.mxu0 0.0
        %877 = vmatpush1.msra.mxu0 0.0
        %878 = vmatprep.subr.mxu0 0.0
        %879 = vmatpush1.msra.mxu0 0.0
        %880 = vmatprep.subr.mxu0 0.0
        %881 = vmatpush1.msra.mxu0 0.0
        %882 = vmatprep.subr.mxu0 0.0
        %883 = vmatpush1.msra.mxu0 0.0
        %884 = vmatprep.subr.mxu0 0.0
        %885 = vmatpush1.msra.mxu0 0.0
        %886 = vmatprep.subr.mxu0 0.0
        %887 = vmatpush1.msra.mxu0 0.0
        %888 = vmatprep.subr.mxu0 0.0
        %889 = vmatpush1.msra.mxu0 0.0
        %890 = vmatprep.subr.mxu0 0.0
        %891 = vmatpush1.msra.mxu0 0.0
        %892 = vmatprep.subr.mxu0 0.0
        %893 = vmatpush1.msra.mxu0 0.0
        %894 = vmatprep.subr.mxu0 0.0
        %895 = vmatpush1.msra.mxu0 0.0
        %896 = vmatprep.mubr.f32.mxu0 0.0
        %897 = vmatmul.mubr.f32.gmra.mrb[0].mxu0 %v830
        %v898 = vpop.f32.mrb[0].mxu0
        %v899 = vadd.f32 0.0, %v898
        %v900 = vpop.f32.mrb[0].mxu0
        %901 = vdwg.mxu0
        %v903 = vsel %vm496, %v655, 0
        %905 = vmatprep.subr.mxu0 0.0
        %906 = vmatpush1.msra.mxu0 %v658
        %907 = vmatprep.subr.mxu0 0.0
        %908 = vmatpush1.msra.mxu0 0.0
        %909 = vmatprep.subr.mxu0 0.0
        %910 = vmatpush1.msra.mxu0 0.0
        %911 = vmatprep.subr.mxu0 0.0
        %912 = vmatpush1.msra.mxu0 0.0
        %913 = vmatprep.subr.mxu0 0.0
        %914 = vmatpush1.msra.mxu0 0.0
        %915 = vmatprep.subr.mxu0 0.0
        %916 = vmatpush1.msra.mxu0 0.0
        %917 = vmatprep.subr.mxu0 0.0
        %918 = vmatpush1.msra.mxu0 0.0
        %919 = vmatprep.subr.mxu0 0.0
        %920 = vmatpush1.msra.mxu0 0.0
        %921 = vmatprep.subr.mxu0 0.0
        %922 = vmatpush1.msra.mxu0 0.0
        %923 = vmatprep.subr.mxu0 0.0
        %924 = vmatpush1.msra.mxu0 0.0
        %925 = vmatprep.subr.mxu0 0.0
        %926 = vmatpush1.msra.mxu0 0.0
        %927 = vmatprep.subr.mxu0 0.0
        %928 = vmatpush1.msra.mxu0 0.0
        %929 = vmatprep.subr.mxu0 0.0
        %930 = vmatpush1.msra.mxu0 0.0
        %931 = vmatprep.subr.mxu0 0.0
        %932 = vmatpush1.msra.mxu0 0.0
        %933 = vmatprep.subr.mxu0 0.0
        %934 = vmatpush1.msra.mxu0 0.0
        %935 = vmatprep.subr.mxu0 0.0
        %936 = vmatpush1.msra.mxu0 0.0
        %937 = vmatprep.subr.mxu0 0.0
        %938 = vmatpush1.msra.mxu0 0.0
        %939 = vmatprep.subr.mxu0 0.0
        %940 = vmatpush1.msra.mxu0 0.0
        %941 = vmatprep.subr.mxu0 0.0
        %942 = vmatpush1.msra.mxu0 0.0
        %943 = vmatprep.subr.mxu0 0.0
        %944 = vmatpush1.msra.mxu0 0.0
        %945 = vmatprep.subr.mxu0 0.0
        %946 = vmatpush1.msra.mxu0 0.0
        %947 = vmatprep.subr.mxu0 0.0
        %948 = vmatpush1.msra.mxu0 0.0
        %949 = vmatprep.subr.mxu0 0.0
        %950 = vmatpush1.msra.mxu0 0.0
        %951 = vmatprep.subr.mxu0 0.0
        %952 = vmatpush1.msra.mxu0 0.0
        %953 = vmatprep.subr.mxu0 0.0
        %954 = vmatpush1.msra.mxu0 0.0
        %955 = vmatprep.subr.mxu0 0.0
        %956 = vmatpush1.msra.mxu0 0.0
        %957 = vmatprep.subr.mxu0 0.0
        %958 = vmatpush1.msra.mxu0 0.0
        %959 = vmatprep.subr.mxu0 0.0
        %960 = vmatpush1.msra.mxu0 0.0
        %961 = vmatprep.subr.mxu0 0.0
        %962 = vmatpush1.msra.mxu0 0.0
        %963 = vmatprep.subr.mxu0 0.0
        %964 = vmatpush1.msra.mxu0 0.0
        %965 = vmatprep.subr.mxu0 0.0
        %966 = vmatpush1.msra.mxu0 0.0
        %967 = vmatprep.subr.mxu0 0.0
        %968 = vmatpush1.msra.mxu0 0.0
        %969 = vmatprep.mubr.f32.mxu0 0.0
        %970 = vmatmul.mubr.f32.gmra.mrb[0].mxu0 %v903
        %v971 = vpop.f32.mrb[0].mxu0
        %v972 = vadd.f32 %v899, %v971
        %v973 = vpop.f32.mrb[0].mxu0
        %974 = vdwg.mxu0
        %975 = vrot.lane.b32.xlu0 %v319, 112
        %v976 = vpop.permute.xlu0 %975
        %977 = vrot.lane.b32.xlu0 %v406, 112
        %v978 = vpop.permute.xlu0 %977
        %v979 = vsel %vm496, %v976, 0
        %v981 = vsel %vm496, %v978, 0
        %983 = vmatprep.subr.mxu0 0.0
        %984 = vmatpush1.xpose.msra.mxu0 %v981
        %985 = vmatprep.subr.mxu0 0.0
        %986 = vmatpush1.xpose.msra.mxu0 0.0
        %987 = vmatprep.subr.mxu0 0.0
        %988 = vmatpush1.xpose.msra.mxu0 0.0
        %989 = vmatprep.subr.mxu0 0.0
        %990 = vmatpush1.xpose.msra.mxu0 0.0
        %991 = vmatprep.subr.mxu0 0.0
        %992 = vmatpush1.xpose.msra.mxu0 0.0
        %993 = vmatprep.subr.mxu0 0.0
        %994 = vmatpush1.xpose.msra.mxu0 0.0
        %995 = vmatprep.subr.mxu0 0.0
        %996 = vmatpush1.xpose.msra.mxu0 0.0
        %997 = vmatprep.subr.mxu0 0.0
        %998 = vmatpush1.xpose.msra.mxu0 0.0
        %999 = vmatprep.subr.mxu0 0.0
        %1000 = vmatpush1.xpose.msra.mxu0 0.0
        %1001 = vmatprep.subr.mxu0 0.0
        %1002 = vmatpush1.xpose.msra.mxu0 0.0
        %1003 = vmatprep.subr.mxu0 0.0
        %1004 = vmatpush1.xpose.msra.mxu0 0.0
        %1005 = vmatprep.subr.mxu0 0.0
        %1006 = vmatpush1.xpose.msra.mxu0 0.0
        %1007 = vmatprep.subr.mxu0 0.0
        %1008 = vmatpush1.xpose.msra.mxu0 0.0
        %1009 = vmatprep.subr.mxu0 0.0
        %1010 = vmatpush1.xpose.msra.mxu0 0.0
        %1011 = vmatprep.subr.mxu0 0.0
        %1012 = vmatpush1.xpose.msra.mxu0 0.0
        %1013 = vmatprep.subr.mxu0 0.0
        %1014 = vmatpush1.xpose.msra.mxu0 0.0
        %1015 = vmatprep.subr.mxu0 0.0
        %1016 = vmatpush1.xpose.msra.mxu0 0.0
        %1017 = vmatprep.subr.mxu0 0.0
        %1018 = vmatpush1.xpose.msra.mxu0 0.0
        %1019 = vmatprep.subr.mxu0 0.0
        %1020 = vmatpush1.xpose.msra.mxu0 0.0
        %1021 = vmatprep.subr.mxu0 0.0
        %1022 = vmatpush1.xpose.msra.mxu0 0.0
        %1023 = vmatprep.subr.mxu0 0.0
        %1024 = vmatpush1.xpose.msra.mxu0 0.0
        %1025 = vmatprep.subr.mxu0 0.0
        %1026 = vmatpush1.xpose.msra.mxu0 0.0
        %1027 = vmatprep.subr.mxu0 0.0
        %1028 = vmatpush1.xpose.msra.mxu0 0.0
        %1029 = vmatprep.subr.mxu0 0.0
        %1030 = vmatpush1.xpose.msra.mxu0 0.0
        %1031 = vmatprep.subr.mxu0 0.0
        %1032 = vmatpush1.xpose.msra.mxu0 0.0
        %1033 = vmatprep.subr.mxu0 0.0
        %1034 = vmatpush1.xpose.msra.mxu0 0.0
        %1035 = vmatprep.subr.mxu0 0.0
        %1036 = vmatpush1.xpose.msra.mxu0 0.0
        %1037 = vmatprep.subr.mxu0 0.0
        %1038 = vmatpush1.xpose.msra.mxu0 0.0
        %1039 = vmatprep.subr.mxu0 0.0
        %1040 = vmatpush1.xpose.msra.mxu0 0.0
        %1041 = vmatprep.subr.mxu0 0.0
        %1042 = vmatpush1.xpose.msra.mxu0 0.0
        %1043 = vmatprep.subr.mxu0 0.0
        %1044 = vmatpush1.xpose.msra.mxu0 0.0
        %1045 = vmatprep.subr.mxu0 0.0
        %1046 = vmatpush1.xpose.msra.mxu0 0.0
        %1047 = vmatprep.mubr.f32.mxu0 0.0
        %1048 = vmatmul.mubr.f32.gmra.mrb[0].mxu0 %v979
        %v1049 = vpop.f32.mrb[0].mxu0
        %v1050 = vadd.f32 0.0, %v1049
        %v1051 = vpop.f32.mrb[0].mxu0
        %1052 = vdwg.mxu0
        %v1053 = vsel %vm496, %v1050, -inf
        %1054 = vmax.xlane.f32.xlu0 %v1053
        %v1055 = vpop.xlane.xlu0 %1054
        %v1056 = vsub.f32 %v1050, %v1055
        %v1057 = vmul.f32 %v1056, 1.442695
        %v1058 = vpow.pop %v1057
        %v1059 = vsel %vm496, %v1058, 0.0
        %1060 = vadd.xlane.f32.xlu0 %v1059
        %v1061 = vpop.xlane.xlu0 %1060
        %v1062 = vrcp.pop %v1061
        %v1063 = vmul.f32 %v1058, %v1062
        %s1064 = scalar_lea.vmem %s226, 16 [#allocation4]
        %1065 = vst.msk [vmem:[%s1064] sm:$0xff] %vm496, %v1063
        %1066 = vrot.lane.b32.xlu0 %v493, 112
        %v1067 = vpop.permute.xlu0 %1066
        %v1070 = vsel %vm496, %v1063, 0
        %1072 = vmatprep.subr.mxu0 0.0
        %1073 = vmatpush1.msra.mxu0 %v1067
        %1074 = vmatprep.subr.mxu0 0.0
        %1075 = vmatpush1.msra.mxu0 0.0
        %1076 = vmatprep.subr.mxu0 0.0
        %1077 = vmatpush1.msra.mxu0 0.0
        %1078 = vmatprep.subr.mxu0 0.0
        %1079 = vmatpush1.msra.mxu0 0.0
        %1080 = vmatprep.subr.mxu0 0.0
        %1081 = vmatpush1.msra.mxu0 0.0
        %1082 = vmatprep.subr.mxu0 0.0
        %1083 = vmatpush1.msra.mxu0 0.0
        %1084 = vmatprep.subr.mxu0 0.0
        %1085 = vmatpush1.msra.mxu0 0.0
        %1086 = vmatprep.subr.mxu0 0.0
        %1087 = vmatpush1.msra.mxu0 0.0
        %1088 = vmatprep.subr.mxu0 0.0
        %1089 = vmatpush1.msra.mxu0 0.0
        %1090 = vmatprep.subr.mxu0 0.0
        %1091 = vmatpush1.msra.mxu0 0.0
        %1092 = vmatprep.subr.mxu0 0.0
        %1093 = vmatpush1.msra.mxu0 0.0
        %1094 = vmatprep.subr.mxu0 0.0
        %1095 = vmatpush1.msra.mxu0 0.0
        %1096 = vmatprep.subr.mxu0 0.0
        %1097 = vmatpush1.msra.mxu0 0.0
        %1098 = vmatprep.subr.mxu0 0.0
        %1099 = vmatpush1.msra.mxu0 0.0
        %1100 = vmatprep.subr.mxu0 0.0
        %1101 = vmatpush1.msra.mxu0 0.0
        %1102 = vmatprep.subr.mxu0 0.0
        %1103 = vmatpush1.msra.mxu0 0.0
        %1104 = vmatprep.subr.mxu0 0.0
        %1105 = vmatpush1.msra.mxu0 0.0
        %1106 = vmatprep.subr.mxu0 0.0
        %1107 = vmatpush1.msra.mxu0 0.0
        %1108 = vmatprep.subr.mxu0 0.0
        %1109 = vmatpush1.msra.mxu0 0.0
        %1110 = vmatprep.subr.mxu0 0.0
        %1111 = vmatpush1.msra.mxu0 0.0
        %1112 = vmatprep.subr.mxu0 0.0
        %1113 = vmatpush1.msra.mxu0 0.0
        %1114 = vmatprep.subr.mxu0 0.0
        %1115 = vmatpush1.msra.mxu0 0.0
        %1116 = vmatprep.subr.mxu0 0.0
        %1117 = vmatpush1.msra.mxu0 0.0
        %1118 = vmatprep.subr.mxu0 0.0
        %1119 = vmatpush1.msra.mxu0 0.0
        %1120 = vmatprep.subr.mxu0 0.0
        %1121 = vmatpush1.msra.mxu0 0.0
        %1122 = vmatprep.subr.mxu0 0.0
        %1123 = vmatpush1.msra.mxu0 0.0
        %1124 = vmatprep.subr.mxu0 0.0
        %1125 = vmatpush1.msra.mxu0 0.0
        %1126 = vmatprep.subr.mxu0 0.0
        %1127 = vmatpush1.msra.mxu0 0.0
        %1128 = vmatprep.subr.mxu0 0.0
        %1129 = vmatpush1.msra.mxu0 0.0
        %1130 = vmatprep.subr.mxu0 0.0
        %1131 = vmatpush1.msra.mxu0 0.0
        %1132 = vmatprep.subr.mxu0 0.0
        %1133 = vmatpush1.msra.mxu0 0.0
        %1134 = vmatprep.subr.mxu0 0.0
        %1135 = vmatpush1.msra.mxu0 0.0
        %1136 = vmatprep.mubr.f32.mxu0 0.0
        %1137 = vmatmul.mubr.f32.gmra.mrb[0].mxu0 %v1070
        %v1138 = vpop.f32.mrb[0].mxu0
        %v1139 = vadd.f32 0.0, %v1138
        %v1140 = vpop.f32.mrb[0].mxu0
        %1141 = vdwg.mxu0
        %s1142 = scalar_lea.vmem %s2, 16
        %v1143 = vld [vmem:[%s1142] sm:$0xff]
        %v1145 = vsel %vm496, %v1139, 0
        %1147 = vmatprep.subr.mxu0 0.0
        %1148 = vmatpush1.msra.mxu0 %v1143
        %1149 = vmatprep.subr.mxu0 0.0
        %1150 = vmatpush1.msra.mxu0 0.0
        %1151 = vmatprep.subr.mxu0 0.0
        %1152 = vmatpush1.msra.mxu0 0.0
        %1153 = vmatprep.subr.mxu0 0.0
        %1154 = vmatpush1.msra.mxu0 0.0
        %1155 = vmatprep.subr.mxu0 0.0
        %1156 = vmatpush1.msra.mxu0 0.0
        %1157 = vmatprep.subr.mxu0 0.0
        %1158 = vmatpush1.msra.mxu0 0.0
        %1159 = vmatprep.subr.mxu0 0.0
        %1160 = vmatpush1.msra.mxu0 0.0
        %1161 = vmatprep.subr.mxu0 0.0
        %1162 = vmatpush1.msra.mxu0 0.0
        %1163 = vmatprep.subr.mxu0 0.0
        %1164 = vmatpush1.msra.mxu0 0.0
        %1165 = vmatprep.subr.mxu0 0.0
        %1166 = vmatpush1.msra.mxu0 0.0
        %1167 = vmatprep.subr.mxu0 0.0
        %1168 = vmatpush1.msra.mxu0 0.0
        %1169 = vmatprep.subr.mxu0 0.0
        %1170 = vmatpush1.msra.mxu0 0.0
        %1171 = vmatprep.subr.mxu0 0.0
        %1172 = vmatpush1.msra.mxu0 0.0
        %1173 = vmatprep.subr.mxu0 0.0
        %1174 = vmatpush1.msra.mxu0 0.0
        %1175 = vmatprep.subr.mxu0 0.0
        %1176 = vmatpush1.msra.mxu0 0.0
        %1177 = vmatprep.subr.mxu0 0.0
        %1178 = vmatpush1.msra.mxu0 0.0
        %1179 = vmatprep.subr.mxu0 0.0
        %1180 = vmatpush1.msra.mxu0 0.0
        %1181 = vmatprep.subr.mxu0 0.0
        %1182 = vmatpush1.msra.mxu0 0.0
        %1183 = vmatprep.subr.mxu0 0.0
        %1184 = vmatpush1.msra.mxu0 0.0
        %1185 = vmatprep.subr.mxu0 0.0
        %1186 = vmatpush1.msra.mxu0 0.0
        %1187 = vmatprep.subr.mxu0 0.0
        %1188 = vmatpush1.msra.mxu0 0.0
        %1189 = vmatprep.subr.mxu0 0.0
        %1190 = vmatpush1.msra.mxu0 0.0
        %1191 = vmatprep.subr.mxu0 0.0
        %1192 = vmatpush1.msra.mxu0 0.0
        %1193 = vmatprep.subr.mxu0 0.0
        %1194 = vmatpush1.msra.mxu0 0.0
        %1195 = vmatprep.subr.mxu0 0.0
        %1196 = vmatpush1.msra.mxu0 0.0
        %1197 = vmatprep.subr.mxu0 0.0
        %1198 = vmatpush1.msra.mxu0 0.0
        %1199 = vmatprep.subr.mxu0 0.0
        %1200 = vmatpush1.msra.mxu0 0.0
        %1201 = vmatprep.subr.mxu0 0.0
        %1202 = vmatpush1.msra.mxu0 0.0
        %1203 = vmatprep.subr.mxu0 0.0
        %1204 = vmatpush1.msra.mxu0 0.0
        %1205 = vmatprep.subr.mxu0 0.0
        %1206 = vmatpush1.msra.mxu0 0.0
        %1207 = vmatprep.subr.mxu0 0.0
        %1208 = vmatpush1.msra.mxu0 0.0
        %1209 = vmatprep.subr.mxu0 0.0
        %1210 = vmatpush1.msra.mxu0 0.0
        %1211 = vmatprep.mubr.f32.mxu0 0.0
        %1212 = vmatmul.mubr.f32.gmra.mrb[0].mxu0 %v1145
        %v1213 = vpop.f32.mrb[0].mxu0
        %v1214 = vadd.f32 0.0, %v1213
        %v1215 = vpop.f32.mrb[0].mxu0
        %1216 = vdwg.mxu0
        %v1217 = vadd.f32 %v972, %v1214
        %1218 = vrot.lane.b32.xlu0 %v319, 104
        %v1219 = vpop.permute.xlu0 %1218
        %1220 = vrot.lane.b32.xlu0 %v406, 104
        %v1221 = vpop.permute.xlu0 %1220
        %v1222 = vsel %vm496, %v1219, 0
        %v1224 = vsel %vm496, %v1221, 0
        %1226 = vmatprep.subr.mxu0 0.0
        %1227 = vmatpush1.xpose.msra.mxu0 %v1224
        %1228 = vmatprep.subr.mxu0 0.0
        %1229 = vmatpush1.xpose.msra.mxu0 0.0
        %1230 = vmatprep.subr.mxu0 0.0
        %1231 = vmatpush1.xpose.msra.mxu0 0.0
        %1232 = vmatprep.subr.mxu0 0.0
        %1233 = vmatpush1.xpose.msra.mxu0 0.0
        %1234 = vmatprep.subr.mxu0 0.0
        %1235 = vmatpush1.xpose.msra.mxu0 0.0
        %1236 = vmatprep.subr.mxu0 0.0
        %1237 = vmatpush1.xpose.msra.mxu0 0.0
        %1238 = vmatprep.subr.mxu0 0.0
        %1239 = vmatpush1.xpose.msra.mxu0 0.0
        %1240 = vmatprep.subr.mxu0 0.0
        %1241 = vmatpush1.xpose.msra.mxu0 0.0
        %1242 = vmatprep.subr.mxu0 0.0
        %1243 = vmatpush1.xpose.msra.mxu0 0.0
        %1244 = vmatprep.subr.mxu0 0.0
        %1245 = vmatpush1.xpose.msra.mxu0 0.0
        %1246 = vmatprep.subr.mxu0 0.0
        %1247 = vmatpush1.xpose.msra.mxu0 0.0
        %1248 = vmatprep.subr.mxu0 0.0
        %1249 = vmatpush1.xpose.msra.mxu0 0.0
        %1250 = vmatprep.subr.mxu0 0.0
        %1251 = vmatpush1.xpose.msra.mxu0 0.0
        %1252 = vmatprep.subr.mxu0 0.0
        %1253 = vmatpush1.xpose.msra.mxu0 0.0
        %1254 = vmatprep.subr.mxu0 0.0
        %1255 = vmatpush1.xpose.msra.mxu0 0.0
        %1256 = vmatprep.subr.mxu0 0.0
        %1257 = vmatpush1.xpose.msra.mxu0 0.0
        %1258 = vmatprep.subr.mxu0 0.0
        %1259 = vmatpush1.xpose.msra.mxu0 0.0
        %1260 = vmatprep.subr.mxu0 0.0
        %1261 = vmatpush1.xpose.msra.mxu0 0.0
        %1262 = vmatprep.subr.mxu0 0.0
        %1263 = vmatpush1.xpose.msra.mxu0 0.0
        %1264 = vmatprep.subr.mxu0 0.0
        %1265 = vmatpush1.xpose.msra.mxu0 0.0
        %1266 = vmatprep.subr.mxu0 0.0
        %1267 = vmatpush1.xpose.msra.mxu0 0.0
        %1268 = vmatprep.subr.mxu0 0.0
        %1269 = vmatpush1.xpose.msra.mxu0 0.0
        %1270 = vmatprep.subr.mxu0 0.0
        %1271 = vmatpush1.xpose.msra.mxu0 0.0
        %1272 = vmatprep.subr.mxu0 0.0
        %1273 = vmatpush1.xpose.msra.mxu0 0.0
        %1274 = vmatprep.subr.mxu0 0.0
        %1275 = vmatpush1.xpose.msra.mxu0 0.0
        %1276 = vmatprep.subr.mxu0 0.0
        %1277 = vmatpush1.xpose.msra.mxu0 0.0
        %1278 = vmatprep.subr.mxu0 0.0
        %1279 = vmatpush1.xpose.msra.mxu0 0.0
        %1280 = vmatprep.subr.mxu0 0.0
        %1281 = vmatpush1.xpose.msra.mxu0 0.0
        %1282 = vmatprep.subr.mxu0 0.0
        %1283 = vmatpush1.xpose.msra.mxu0 0.0
        %1284 = vmatprep.subr.mxu0 0.0
        %1285 = vmatpush1.xpose.msra.mxu0 0.0
        %1286 = vmatprep.subr.mxu0 0.0
        %1287 = vmatpush1.xpose.msra.mxu0 0.0
        %1288 = vmatprep.subr.mxu0 0.0
        %1289 = vmatpush1.xpose.msra.mxu0 0.0
        %1290 = vmatprep.mubr.f32.mxu0 0.0
        %1291 = vmatmul.mubr.f32.gmra.mrb[0].mxu0 %v1222
        %v1292 = vpop.f32.mrb[0].mxu0
        %v1293 = vadd.f32 0.0, %v1292
        %v1294 = vpop.f32.mrb[0].mxu0
        %1295 = vdwg.mxu0
        %v1296 = vsel %vm496, %v1293, -inf
        %1297 = vmax.xlane.f32.xlu0 %v1296
        %v1298 = vpop.xlane.xlu0 %1297
        %v1299 = vsub.f32 %v1293, %v1298
        %v1300 = vmul.f32 %v1299, 1.442695
        %v1301 = vpow.pop %v1300
        %v1302 = vsel %vm496, %v1301, 0.0
        %1303 = vadd.xlane.f32.xlu0 %v1302
        %v1304 = vpop.xlane.xlu0 %1303
        %v1305 = vrcp.pop %v1304
        %v1306 = vmul.f32 %v1301, %v1305
        %s1307 = scalar_lea.vmem %s226, 24 [#allocation4]
        %1308 = vst.msk [vmem:[%s1307] sm:$0xff] %vm496, %v1306
        %1309 = vrot.lane.b32.xlu0 %v493, 104
        %v1310 = vpop.permute.xlu0 %1309
        %v1313 = vsel %vm496, %v1306, 0
        %1315 = vmatprep.subr.mxu0 0.0
        %1316 = vmatpush1.msra.mxu0 %v1310
        %1317 = vmatprep.subr.mxu0 0.0
        %1318 = vmatpush1.msra.mxu0 0.0
        %1319 = vmatprep.subr.mxu0 0.0
        %1320 = vmatpush1.msra.mxu0 0.0
        %1321 = vmatprep.subr.mxu0 0.0
        %1322 = vmatpush1.msra.mxu0 0.0
        %1323 = vmatprep.subr.mxu0 0.0
        %1324 = vmatpush1.msra.mxu0 0.0
        %1325 = vmatprep.subr.mxu0 0.0
        %1326 = vmatpush1.msra.mxu0 0.0
        %1327 = vmatprep.subr.mxu0 0.0
        %1328 = vmatpush1.msra.mxu0 0.0
        %1329 = vmatprep.subr.mxu0 0.0
        %1330 = vmatpush1.msra.mxu0 0.0
        %1331 = vmatprep.subr.mxu0 0.0
        %1332 = vmatpush1.msra.mxu0 0.0
        %1333 = vmatprep.subr.mxu0 0.0
        %1334 = vmatpush1.msra.mxu0 0.0
        %1335 = vmatprep.subr.mxu0 0.0
        %1336 = vmatpush1.msra.mxu0 0.0
        %1337 = vmatprep.subr.mxu0 0.0
        %1338 = vmatpush1.msra.mxu0 0.0
        %1339 = vmatprep.subr.mxu0 0.0
        %1340 = vmatpush1.msra.mxu0 0.0
        %1341 = vmatprep.subr.mxu0 0.0
        %1342 = vmatpush1.msra.mxu0 0.0
        %1343 = vmatprep.subr.mxu0 0.0
        %1344 = vmatpush1.msra.mxu0 0.0
        %1345 = vmatprep.subr.mxu0 0.0
        %1346 = vmatpush1.msra.mxu0 0.0
        %1347 = vmatprep.subr.mxu0 0.0
        %1348 = vmatpush1.msra.mxu0 0.0
        %1349 = vmatprep.subr.mxu0 0.0
        %1350 = vmatpush1.msra.mxu0 0.0
        %1351 = vmatprep.subr.mxu0 0.0
        %1352 = vmatpush1.msra.mxu0 0.0
        %1353 = vmatprep.subr.mxu0 0.0
        %1354 = vmatpush1.msra.mxu0 0.0
        %1355 = vmatprep.subr.mxu0 0.0
        %1356 = vmatpush1.msra.mxu0 0.0
        %1357 = vmatprep.subr.mxu0 0.0
        %1358 = vmatpush1.msra.mxu0 0.0
        %1359 = vmatprep.subr.mxu0 0.0
        %1360 = vmatpush1.msra.mxu0 0.0
        %1361 = vmatprep.subr.mxu0 0.0
        %1362 = vmatpush1.msra.mxu0 0.0
        %1363 = vmatprep.subr.mxu0 0.0
        %1364 = vmatpush1.msra.mxu0 0.0
        %1365 = vmatprep.subr.mxu0 0.0
        %1366 = vmatpush1.msra.mxu0 0.0
        %1367 = vmatprep.subr.mxu0 0.0
        %1368 = vmatpush1.msra.mxu0 0.0
        %1369 = vmatprep.subr.mxu0 0.0
        %1370 = vmatpush1.msra.mxu0 0.0
        %1371 = vmatprep.subr.mxu0 0.0
        %1372 = vmatpush1.msra.mxu0 0.0
        %1373 = vmatprep.subr.mxu0 0.0
        %1374 = vmatpush1.msra.mxu0 0.0
        %1375 = vmatprep.subr.mxu0 0.0
        %1376 = vmatpush1.msra.mxu0 0.0
        %1377 = vmatprep.subr.mxu0 0.0
        %1378 = vmatpush1.msra.mxu0 0.0
        %1379 = vmatprep.mubr.f32.mxu0 0.0
        %1380 = vmatmul.mubr.f32.gmra.mrb[0].mxu0 %v1313
        %v1381 = vpop.f32.mrb[0].mxu0
        %v1382 = vadd.f32 0.0, %v1381
        %v1383 = vpop.f32.mrb[0].mxu0
        %1384 = vdwg.mxu0
        %s1385 = scalar_lea.vmem %s2, 24
        %v1386 = vld [vmem:[%s1385] sm:$0xff]
        %v1388 = vsel %vm496, %v1382, 0
        %1390 = vmatprep.subr.mxu0 0.0
        %1391 = vmatpush1.msra.mxu0 %v1386
        %1392 = vmatprep.subr.mxu0 0.0
        %1393 = vmatpush1.msra.mxu0 0.0
        %1394 = vmatprep.subr.mxu0 0.0
        %1395 = vmatpush1.msra.mxu0 0.0
        %1396 = vmatprep.subr.mxu0 0.0
        %1397 = vmatpush1.msra.mxu0 0.0
        %1398 = vmatprep.subr.mxu0 0.0
        %1399 = vmatpush1.msra.mxu0 0.0
        %1400 = vmatprep.subr.mxu0 0.0
        %1401 = vmatpush1.msra.mxu0 0.0
        %1402 = vmatprep.subr.mxu0 0.0
        %1403 = vmatpush1.msra.mxu0 0.0
        %1404 = vmatprep.subr.mxu0 0.0
        %1405 = vmatpush1.msra.mxu0 0.0
        %1406 = vmatprep.subr.mxu0 0.0
        %1407 = vmatpush1.msra.mxu0 0.0
        %1408 = vmatprep.subr.mxu0 0.0
        %1409 = vmatpush1.msra.mxu0 0.0
        %1410 = vmatprep.subr.mxu0 0.0
        %1411 = vmatpush1.msra.mxu0 0.0
        %1412 = vmatprep.subr.mxu0 0.0
        %1413 = vmatpush1.msra.mxu0 0.0
        %1414 = vmatprep.subr.mxu0 0.0
        %1415 = vmatpush1.msra.mxu0 0.0
        %1416 = vmatprep.subr.mxu0 0.0
        %1417 = vmatpush1.msra.mxu0 0.0
        %1418 = vmatprep.subr.mxu0 0.0
        %1419 = vmatpush1.msra.mxu0 0.0
        %1420 = vmatprep.subr.mxu0 0.0
        %1421 = vmatpush1.msra.mxu0 0.0
        %1422 = vmatprep.subr.mxu0 0.0
        %1423 = vmatpush1.msra.mxu0 0.0
        %1424 = vmatprep.subr.mxu0 0.0
        %1425 = vmatpush1.msra.mxu0 0.0
        %1426 = vmatprep.subr.mxu0 0.0
        %1427 = vmatpush1.msra.mxu0 0.0
        %1428 = vmatprep.subr.mxu0 0.0
        %1429 = vmatpush1.msra.mxu0 0.0
        %1430 = vmatprep.subr.mxu0 0.0
        %1431 = vmatpush1.msra.mxu0 0.0
        %1432 = vmatprep.subr.mxu0 0.0
        %1433 = vmatpush1.msra.mxu0 0.0
        %1434 = vmatprep.subr.mxu0 0.0
        %1435 = vmatpush1.msra.mxu0 0.0
        %1436 = vmatprep.subr.mxu0 0.0
        %1437 = vmatpush1.msra.mxu0 0.0
        %1438 = vmatprep.subr.mxu0 0.0
        %1439 = vmatpush1.msra.mxu0 0.0
        %1440 = vmatprep.subr.mxu0 0.0
        %1441 = vmatpush1.msra.mxu0 0.0
        %1442 = vmatprep.subr.mxu0 0.0
        %1443 = vmatpush1.msra.mxu0 0.0
        %1444 = vmatprep.subr.mxu0 0.0
        %1445 = vmatpush1.msra.mxu0 0.0
        %1446 = vmatprep.subr.mxu0 0.0
        %1447 = vmatpush1.msra.mxu0 0.0
        %1448 = vmatprep.subr.mxu0 0.0
        %1449 = vmatpush1.msra.mxu0 0.0
        %1450 = vmatprep.subr.mxu0 0.0
        %1451 = vmatpush1.msra.mxu0 0.0
        %1452 = vmatprep.subr.mxu0 0.0
        %1453 = vmatpush1.msra.mxu0 0.0
        %1454 = vmatprep.mubr.f32.mxu0 0.0
        %1455 = vmatmul.mubr.f32.gmra.mrb[0].mxu0 %v1388
        %v1456 = vpop.f32.mrb[0].mxu0
        %v1457 = vadd.f32 0.0, %v1456
        %v1458 = vpop.f32.mrb[0].mxu0
        %1459 = vdwg.mxu0
        %v1460 = vadd.f32 %v1217, %v1457
        %v1461 = vld [vmem:[%s3] sm:$0x1]
        %v1463 = vlaneseq
        %v1464 = vshrl.u32 %v1463, 7
        %v1465 = vsub.s32 0, %v1464
        %v1466 = vrot.slane %v1461, %v1465
        %v1468 = vadd.f32 %v1460, %v1466
        %1469 = vst.msk [vmem:[%s219] sm:$0xff] %vm236, %v1468
        %s1470 = sand.u32 %s120, 1
        %s1471 = scalar_lea.sflag [#allocation3], %s1470
        %s1472 = sand.u32 %s120, 1
        %s1473 = smul.addr %s1472, 8
        %s1474 = scalar_lea.vmem [#allocation2], %s1473
        %s1475 = sand.u32 %s146, 1
        %s1476 = scalar_lea.sflag [#allocation5], %s1475
        %s1477 = sand.u32 %s146, 1
        %s1478 = smul.addr %s1477, 32
        %s1479 = scalar_lea.vmem [#allocation4], %s1478
        // Predicated region
        $region37: #{attention_pallas.1} parent=35 // pred_check
          %p1480 = pneg %p130
        $region38: #{attention_pallas.1} parent=35 // pred_check_branch
          %1482 = sbr.rel (%p1480) target = $region40
        $region39: #{attention_pallas.1} parent=35 // pred_region
          %s1484 = ssub.s32 128, 128
          %1485 = vsyncadd %s1471, %s1484
          %s1486 = smul.addr %s23, 128
          %s1487 = scalar_lea.hbm %s4, %s1486
          %s1489 = sshll.u32 %s1474, 4
          %s1490 = int_to_ptr.vmem [resolvable:$true] %s1489
          %1492 = dma.vmem_to_hbm [thread:$0]  %s1490, 128, %s1487, %s1471
        $region40: #{attention_pallas.1} parent=35 // pred_fallthru
          _
        // Predicated region
        $region41: #{attention_pallas.1} parent=35 // pred_check
          %p1493 = pneg %p156
        $region42: #{attention_pallas.1} parent=35 // pred_check_branch
          %1495 = sbr.rel (%p1493) target = $region44
        $region43: #{attention_pallas.1} parent=35 // pred_region
          %s1497 = ssub.s32 512, 512
          %1498 = vsyncadd %s1476, %s1497
          %s1499 = smul.addr %s23, 4
          %s1500 = smul.addr %s1499, 128
          %s1501 = scalar_lea.hbm %s5, %s1500
          %s1502 = sshll.u32 %s1479, 4
          %s1503 = int_to_ptr.vmem [resolvable:$true] %s1502
          %1508 = dma.vmem_to_hbm [thread:$0]  %s1503, 512, %s1501, %s1476, 128, 128, 8
        $region44: #{attention_pallas.1} parent=35 // pred_fallthru
          _
      $region36: #{attention_pallas.1} parent=5 // pred_fallthru
        _
      %p1509 = scmp.le.s32.totalorder 2, %s18
      // Predicated region
      $region45: #{attention_pallas.1} parent=5 // pred_check
        %p1510 = pneg %p1509
      $region46: #{attention_pallas.1} parent=5 // pred_check_branch
        %1512 = sbr.rel (%p1510) target = $region48
      $region47: #{attention_pallas.1} parent=5 // pred_region
        %s1513 = ssub.s32 %s18, 2
        // Predicated region
        $region49: #{attention_pallas.1} parent=47 // pred_check
          %p1514 = pneg %p136
        $region50: #{attention_pallas.1} parent=47 // pred_check_branch
          %1516 = sbr.rel (%p1514) target = $region52
        $region51: #{attention_pallas.1} parent=47 // pred_region
          %s1517 = sand.u32 %s121, 1
          %s1518 = scalar_lea.sflag [#allocation3], %s1517
          %s1519 = sand.u32 %s121, 1
          %s1520 = smul.addr %s1519, 8
          %s1521 = scalar_lea.vmem [#allocation2], %s1520
          %1522 = dma.done %s1518, 128
        $region52: #{attention_pallas.1} parent=47 // pred_fallthru
          _
        // Predicated region
        $region53: #{attention_pallas.1} parent=47 // pred_check
          %p1523 = pneg %p162
        $region54: #{attention_pallas.1} parent=47 // pred_check_branch
          %1525 = sbr.rel (%p1523) target = $region56
        $region55: #{attention_pallas.1} parent=47 // pred_region
          %s1526 = sand.u32 %s147, 1
          %s1527 = scalar_lea.sflag [#allocation5], %s1526
          %s1528 = sand.u32 %s147, 1
          %s1529 = smul.addr %s1528, 32
          %s1530 = scalar_lea.vmem [#allocation4], %s1529
          %1531 = dma.done %s1527, 512
        $region56: #{attention_pallas.1} parent=47 // pred_fallthru
          _
      $region48: #{attention_pallas.1} parent=5 // pred_fallthru
        _
    $region6: #{attention_pallas.1} parent=1 // loop_footer
      %s22 = sadd.s32 1, %s18
    $region7: #{attention_pallas.1} parent=1 // loop_footer_branch
      %17 = sbr.rel target = $region3
    $region8: #{attention_pallas.1} parent=1 // loop_exit
      _
    %1532 = vsyncpa [#allocation3], 1
    %s1533 = scalar_lea.sflag [#allocation3], 1
    %1534 = vsyncpa %s1533, 1
    %1535 = vsyncpa [#allocation5], 1
    %s1536 = scalar_lea.sflag [#allocation5], 1
    %1537 = vsyncpa %s1536, 1

</llo_original>
